<compile_context>
chip_gen: v6e
topology: v6e:2x2x1
jax: 0.10.0
libtpu: 0.0.40
codegen_flags: <defaults>
</compile_context>

<pallas_src>
import math

import jax
import jax.numpy as jnp
from jax import lax
from jax.experimental import pallas as pl
from jax.experimental.pallas import tpu as pltpu


def _round_up(x, n):
    return (x + n - 1) // n * n


def _pad2(a, rows, cols):
    return jnp.pad(a, ((0, rows - a.shape[0]), (0, cols - a.shape[1])))


_VMEM_LIMIT_BYTES = 48 * 1024 * 1024   # safe on v5e/v6e (128 MiB) and v7x (64 MiB/TC)
_TILE_BUDGET_BYTES = 36 * 1024 * 1024  # tile-picker budget (leave Mosaic headroom)


# ------------------------------- Pallas kernel -------------------------------

def segrnn_kernel(x_ref, mask_ref, sl_ref, dec_gi_ref,
                  w_emb_ref, b_emb_ref, w_ih_ref, b_gi_ref,
                  w_hh_ref, b_hhn_ref, w_pred_ref, b_pred_ref,
                  recon_ref, imp_ref):
    f32 = jnp.float32
    m, tbc, w = x_ref.shape          # (seg_num, tile rows, seg_len)
    dp = w_hh_ref.shape[0]           # lane-padded d_model (multiple of 128)
    g3 = 3 * dp

    w_emb = w_emb_ref[...]           # (w, dp)
    w_ih = w_ih_ref[...]             # (dp, 3dp)  fused [r|z|n]
    w_hh = w_hh_ref[...]             # (dp, 3dp)
    w_pred = w_pred_ref[...]         # (dp, w)

    # Hoisted bias / seq_last broadcasts (JAX does not CSE broadcast_in_dim).
    b_emb_b = jnp.broadcast_to(b_emb_ref[...], (tbc, dp))
    b_gi_b = jnp.broadcast_to(b_gi_ref[...], (tbc, g3))     # b_ih+b_hh (r,z), b_ih (n)
    b_hhn_b = jnp.broadcast_to(b_hhn_ref[...], (tbc, dp))   # b_hh_n (inside r*(...))
    b_pred_b = jnp.broadcast_to(b_pred_ref[...], (tbc, w))
    sl_b = jnp.broadcast_to(sl_ref[...], (tbc, w))          # per-row seq_last

    def dot(a, b):
        return jnp.dot(a, b, preferred_element_type=f32)

    def gru_cell(gi, h):
        gh = dot(h, w_hh)                                    # one fused MXU issue
        r = jax.nn.sigmoid(gi[:, :dp] + gh[:, :dp])
        z = jax.nn.sigmoid(gi[:, dp:2 * dp] + gh[:, dp:2 * dp])
        n = jnp.tanh(gi[:, 2 * dp:] + r * (gh[:, 2 * dp:] + b_hhn_b))
        return (1.0 - z) * n + z * h

    # ---------------- encoder GRU over the seg_num segments ------------------
    def enc_step(t, h):
        xt = jnp.maximum(dot(x_ref[t], w_emb) + b_emb_b, 0.0)   # valueEmbedding+ReLU
        gi = dot(xt, w_ih) + b_gi_b                              # fused input gates
        return gru_cell(gi, h)

    h0 = jnp.zeros((tbc, dp), f32)
    if m <= 8:
        h = h0
        for t in range(m):
            h = enc_step(t, h)
    else:
        h = lax.fori_loop(0, m, enc_step, h0, unroll=2)

    # ---------------- decoder: one GRU step per output segment ---------------
    # Hidden-side gates are identical for every output segment (all start from
    # hn) -> one matmul total; input-side gates were precomputed in the wrapper.
    gh = dot(h, w_hh)
    ghr = gh[:, :dp]
    ghz = gh[:, dp:2 * dp]
    ghn = gh[:, 2 * dp:] + b_hhn_b

    def dec_step(mi, carry):
        gi = dec_gi_ref[mi]                                   # (tbc, 3dp) precomputed
        r = jax.nn.sigmoid(gi[:, :dp] + ghr)
        z = jax.nn.sigmoid(gi[:, dp:2 * dp] + ghz)
        n = jnp.tanh(gi[:, 2 * dp:] + r * ghn)
        hy = (1.0 - z) * n + z * h
        y = dot(hy, w_pred) + b_pred_b                        # predicted segment
        recon = y + sl_b                                      # de-normalize
        xm = x_ref[mi] + sl_b                                 # original values
        mm = mask_ref[mi]
        recon_ref[mi] = recon
        imp_ref[mi] = mm * xm + (1.0 - mm) * recon
        return carry

    if m <= 8:
        for mi in range(m):
            dec_step(mi, 0)
    else:
        lax.fori_loop(0, m, dec_step, 0, unroll=2)


# -------------------------------- tile picking --------------------------------

def _pick_tile_b(b, c, m, w, dp, budget_bytes, weight_bytes):
    """Largest tile_b such that TBC = tile_b*c is 8-aligned and the per-tile
    VMEM footprint (lane-padded, double-buffered) fits the budget."""
    w_lanes = _round_up(w, 128)
    g3 = 3 * dp
    # Per BC-row bytes (f32): x/mask/recon/imp slabs (x2 double buffer, lane
    # padded), resident decoder gates (counted x2 conservatively), seq_last,
    # plus ~16 d-wide live temporaries of headroom.
    per_row = 4 * (2 * 4 * m * w_lanes + 2 * m * g3 + 2 * 128 + 16 * dp)
    avail = max(budget_bytes - weight_bytes, per_row * 8)
    rows = max(8, avail // per_row)
    t_mult = 8 // math.gcd(c, 8)                 # tile_b multiple => TBC % 8 == 0
    tile_b = max(t_mult, (rows // c) // t_mult * t_mult)
    # Prefer >= 2 grid steps: shards the "parallel" axis across both v7x TCs
    # and gives the pipeline something to overlap on all generations.
    if b >= 2 * t_mult:
        tile_b = min(tile_b, max(t_mult, ((b + 1) // 2) // t_mult * t_mult))
    tile_b = min(tile_b, _round_up(b, t_mult))
    return tile_b


# -------------------------------- JAX wrapper ---------------------------------

def segrnn_forward(X, missing_mask, params, seg_len, d_model):
    """Eval-mode forward of _SegRNN: returns (imputed_data, reconstruction)."""
    b, s, c = X.shape
    assert s % seg_len == 0
    m = s // seg_len
    d = d_model
    w = seg_len
    dp = _round_up(d, 128)        # zero-padding d_model is numerically exact
    g3 = 3 * dp

    # ---- pad / fuse GRU weights (gate order r|z|n, PyTorch nn.GRU) ----------
    w_ih, b_ih = params["w_ih"], params["b_ih"]        # (d, 3d), (1, 3d)
    w_hh, b_hh = params["w_hh"], params["b_hh"]

    def split3(a):
        return a[:, :d], a[:, d:2 * d], a[:, 2 * d:]

    w_ih_p = jnp.concatenate([_pad2(g, dp, dp) for g in split3(w_ih)], axis=1)
    w_hh_p = jnp.concatenate([_pad2(g, dp, dp) for g in split3(w_hh)], axis=1)
    bi, bh = split3(b_ih), split3(b_hh)
    b_gi_p = jnp.concatenate([_pad2(bi[0] + bh[0], 1, dp),
                              _pad2(bi[1] + bh[1], 1, dp),
                              _pad2(bi[2], 1, dp)], axis=1)        # (1, 3dp)
    b_hhn_p = _pad2(bh[2], 1, dp)                                  # (1, dp)
    w_emb_p = _pad2(params["w_emb"], w, dp)                        # (w, dp)
    b_emb_p = _pad2(params["b_emb"], 1, dp)                        # (1, dp)
    w_pred_p = _pad2(params["w_pred"], dp, w)                      # (dp, w)
    b_pred = params["b_pred"]                                      # (1, w)

    weight_bytes = 4 * 2 * (w * dp + 2 * dp * g3 + dp * _round_up(w, 128)
                            + 8 * (2 * g3 + 2 * dp + _round_up(w, 128)))

    tile_b = _pick_tile_b(b, c, m, w, dp, _TILE_BUDGET_BYTES, weight_bytes)
    b_pad = _round_up(b, tile_b)
    TBC = tile_b * c
    BCp = b_pad * c
    grid = (b_pad // tile_b,)

    # ---- layout glue (XLA): pad batch, normalize, segment to (m, BCp, w) ----
    Xp = jnp.pad(X, ((0, b_pad - b), (0, 0), (0, 0)))
    Mp = jnp.pad(missing_mask, ((0, b_pad - b), (0, 0), (0, 0)))
    seq_last = Xp[:, -1:, :]                                       # (b_pad, 1, c)
    x_seg = jnp.transpose(Xp - seq_last, (0, 2, 1)).reshape(BCp, m, w)
    x_seg = jnp.transpose(x_seg, (1, 0, 2))                        # (m, BCp, w)
    m_seg = jnp.transpose(Mp, (0, 2, 1)).reshape(BCp, m, w)
    m_seg = jnp.transpose(m_seg, (1, 0, 2))
    sl = jnp.transpose(seq_last, (0, 2, 1)).reshape(BCp, 1)        # (BCp, 1)

    # ---- decoder input-side gates, precomputed once at tile height ----------
    half = d // 2
    pe = jnp.concatenate(
        [jnp.broadcast_to(params["pos_emb"][None, :, :], (c, m, half)),
         jnp.broadcast_to(params["channel_emb"][:, None, :], (c, m, half))],
        axis=-1).reshape(c * m, d)
    pe = _pad2(pe, c * m, dp)
    dec_gi = (pe @ w_ih_p + b_gi_p).reshape(c, m, g3)
    dec_gi = jnp.transpose(dec_gi, (1, 0, 2))                      # (m, c, 3dp)
    dec_gi = jnp.broadcast_to(dec_gi[:, None, :, :],
                              (m, tile_b, c, g3)).reshape(m, TBC, g3)

    data_spec = pl.BlockSpec((m, TBC, w), lambda i: (0, i, 0))
    in_specs = [
        data_spec,                                             # x_seg (normalized)
        data_spec,                                             # missing mask
        pl.BlockSpec((TBC, 1), lambda i: (i, 0)),              # seq_last per row
        pl.BlockSpec((m, TBC, g3), lambda i: (0, 0, 0)),       # decoder gates (resident)
        pl.BlockSpec((w, dp), lambda i: (0, 0)),               # w_emb
        pl.BlockSpec((1, dp), lambda i: (0, 0)),               # b_emb
        pl.BlockSpec((dp, g3), lambda i: (0, 0)),              # w_ih fused
        pl.BlockSpec((1, g3), lambda i: (0, 0)),               # folded gate bias
        pl.BlockSpec((dp, g3), lambda i: (0, 0)),              # w_hh fused
        pl.BlockSpec((1, dp), lambda i: (0, 0)),               # b_hh_n
        pl.BlockSpec((dp, w), lambda i: (0, 0)),               # w_pred
        pl.BlockSpec((1, w), lambda i: (0, 0)),                # b_pred
    ]
    out_specs = (data_spec, data_spec)

    flops = BCp * (m * (2 * w * dp + 4 * dp * g3 + 2 * dp * w) + 2 * dp * g3)
    transcend = 6 * BCp * m * dp
    bytes_acc = 4 * (4 * BCp * m * w + BCp + TBC * m * g3
                     + 2 * dp * g3 + 2 * w * dp + 3 * g3 + 2 * dp + 2 * w)

    recon_seg, imp_seg = pl.pallas_call(
        segrnn_kernel,
        out_shape=(jax.ShapeDtypeStruct((m, BCp, w), jnp.float32),
                   jax.ShapeDtypeStruct((m, BCp, w), jnp.float32)),
        grid=grid,
        in_specs=in_specs,
        out_specs=out_specs,
        compiler_params=pltpu.CompilerParams(
            dimension_semantics=("parallel",),
            vmem_limit_bytes=_VMEM_LIMIT_BYTES),
        cost_estimate=pl.CostEstimate(flops=int(flops),
                                      transcendentals=int(transcend),
                                      bytes_accessed=int(bytes_acc)),
    )(x_seg, m_seg, sl, dec_gi, w_emb_p, b_emb_p, w_ih_p, b_gi_p,
      w_hh_p, b_hhn_p, w_pred_p, b_pred)

    # ---- layout glue back to (b, s, c), dropping batch padding --------------
    recon = jnp.transpose(recon_seg, (1, 0, 2)).reshape(b_pad, c, s)[:b]
    recon = jnp.transpose(recon, (0, 2, 1))
    imputed = jnp.transpose(imp_seg, (1, 0, 2)).reshape(b_pad, c, s)[:b]
    imputed = jnp.transpose(imputed, (0, 2, 1))
    return imputed, recon


# --------------------------- pure-JAX reference (check) ------------------------

def segrnn_reference(X, missing_mask, params, seg_len, d_model):
    b, s, c = X.shape
    seg_num = s // seg_len
    half = d_model // 2

    seq_last = X[:, -1:, :]
    xn = jnp.transpose(X - seq_last, (0, 2, 1)).reshape(b * c, seg_num, seg_len)

    def gru(x, h):
        gi = x @ params["w_ih"] + params["b_ih"]
        gh = h @ params["w_hh"] + params["b_hh"]
        d = d_model
        r = jax.nn.sigmoid(gi[:, :d] + gh[:, :d])
        z = jax.nn.sigmoid(gi[:, d:2 * d] + gh[:, d:2 * d])
        n = jnp.tanh(gi[:, 2 * d:] + r * gh[:, 2 * d:])
        return (1.0 - z) * n + z * h

    h = jnp.zeros((b * c, d_model), jnp.float32)
    for t in range(seg_num):
        xt = jax.nn.relu(xn[:, t, :] @ params["w_emb"] + params["b_emb"])
        h = gru(xt, h)

    pe = jnp.concatenate(
        [jnp.broadcast_to(params["pos_emb"][None], (c, seg_num, half)),
         jnp.broadcast_to(params["channel_emb"][:, None], (c, seg_num, half))],
        axis=-1)
    pos_full = jnp.broadcast_to(pe[None], (b, c, seg_num, d_model)).reshape(
        b * c, seg_num, d_model)

    outs = []
    for mi in range(seg_num):
        hy = gru(pos_full[:, mi, :], h)
        outs.append(hy @ params["w_pred"] + params["b_pred"])
    y = jnp.stack(outs, axis=1).reshape(b, c, s)
    recon = jnp.transpose(y, (0, 2, 1)) + seq_last
    imputed = missing_mask * X + (1.0 - missing_mask) * recon
    return imputed, recon


# ------------------------------------ main --------------------------------------

if __name__ == "__main__":
    batch, n_steps, n_features = 4, 16, 4
    seg_len, d_model = 8, 32
    assert n_steps % seg_len == 0
    seg_num = n_steps // seg_len

    key = jax.random.PRNGKey(0)
    keys = jax.random.split(key, 12)
    scale = 0.1
    params = {
        "w_emb":       scale * jax.random.normal(keys[0], (seg_len, d_model), jnp.float32),
        "b_emb":       scale * jax.random.normal(keys[1], (1, d_model), jnp.float32),
        "w_ih":        scale * jax.random.normal(keys[2], (d_model, 3 * d_model), jnp.float32),
        "b_ih":        scale * jax.random.normal(keys[3], (1, 3 * d_model), jnp.float32),
        "w_hh":        scale * jax.random.normal(keys[4], (d_model, 3 * d_model), jnp.float32),
        "b_hh":        scale * jax.random.normal(keys[5], (1, 3 * d_model), jnp.float32),
        "w_pred":      scale * jax.random.normal(keys[6], (d_model, seg_len), jnp.float32),
        "b_pred":      scale * jax.random.normal(keys[7], (1, seg_len), jnp.float32),
        "pos_emb":     jax.random.normal(keys[8], (seg_num, d_model // 2), jnp.float32),
        "channel_emb": jax.random.normal(keys[9], (n_features, d_model // 2), jnp.float32),
    }

    X = jax.random.normal(keys[10], (batch, n_steps, n_features), jnp.float32)
    missing_mask = (jax.random.uniform(keys[11], (batch, n_steps, n_features))
                    > 0.3).astype(jnp.float32)

    imputed, recon = segrnn_forward(X, missing_mask, params, seg_len, d_model)
    imputed = jax.block_until_ready(imputed)
    recon = jax.block_until_ready(recon)

    ref_imputed, ref_recon = segrnn_reference(X, missing_mask, params,
                                              seg_len, d_model)
    assert jnp.allclose(recon, ref_recon, rtol=1e-4, atol=1e-4)
    assert jnp.allclose(imputed, ref_imputed, rtol=1e-4, atol=1e-4)

    print("KERNEL_OK")
</pallas_src>

<mosaic_0001>
module attributes {stable_mosaic.version = 11 : i64} {
  func.func @segrnn_kernel(%arg0: i32, %arg1: memref<2x8x8xf32, #tpu.memory_space<vmem>>, %arg2: memref<2x8x8xf32, #tpu.memory_space<vmem>>, %arg3: memref<8x1xf32, #tpu.memory_space<vmem>>, %arg4: memref<2x8x384xf32, #tpu.memory_space<vmem>>, %arg5: memref<8x128xf32, #tpu.memory_space<vmem>>, %arg6: memref<1x128xf32, #tpu.memory_space<vmem>>, %arg7: memref<128x384xf32, #tpu.memory_space<vmem>>, %arg8: memref<1x384xf32, #tpu.memory_space<vmem>>, %arg9: memref<128x384xf32, #tpu.memory_space<vmem>>, %arg10: memref<1x128xf32, #tpu.memory_space<vmem>>, %arg11: memref<128x8xf32, #tpu.memory_space<vmem>>, %arg12: memref<1x8xf32, #tpu.memory_space<vmem>>, %arg13: memref<2x8x8xf32, #tpu.memory_space<vmem>>, %arg14: memref<2x8x8xf32, #tpu.memory_space<vmem>>) attributes {dimension_semantics = [#tpu.dimension_semantics<parallel>], iteration_bounds = array<i64: 2>, scalar_prefetch = 0 : i64, scratch_operands = 0 : i64, tpu.core_type = #tpu.core_type<tc>, window_params = [{transform_indices = @transform_0, window_bounds = array<i64: 2, 8, 8>}, {transform_indices = @transform_1, window_bounds = array<i64: 2, 8, 8>}, {transform_indices = @transform_2, window_bounds = array<i64: 8, 1>}, {pipeline_mode = #tpu.pipeline_mode<synchronous>, transform_indices = @transform_3, window_bounds = array<i64: 2, 8, 384>}, {pipeline_mode = #tpu.pipeline_mode<synchronous>, transform_indices = @transform_4, window_bounds = array<i64: 8, 128>}, {pipeline_mode = #tpu.pipeline_mode<synchronous>, transform_indices = @transform_5, window_bounds = array<i64: 1, 128>}, {pipeline_mode = #tpu.pipeline_mode<synchronous>, transform_indices = @transform_6, window_bounds = array<i64: 128, 384>}, {pipeline_mode = #tpu.pipeline_mode<synchronous>, transform_indices = @transform_7, window_bounds = array<i64: 1, 384>}, {pipeline_mode = #tpu.pipeline_mode<synchronous>, transform_indices = @transform_8, window_bounds = array<i64: 128, 384>}, {pipeline_mode = #tpu.pipeline_mode<synchronous>, transform_indices = @transform_9, window_bounds = array<i64: 1, 128>}, {pipeline_mode = #tpu.pipeline_mode<synchronous>, transform_indices = @transform_10, window_bounds = array<i64: 128, 8>}, {pipeline_mode = #tpu.pipeline_mode<synchronous>, transform_indices = @transform_11, window_bounds = array<i64: 1, 8>}, {transform_indices = @transform_12, window_bounds = array<i64: 2, 8, 8>}, {transform_indices = @transform_13, window_bounds = array<i64: 2, 8, 8>}]} {
    %c0 = arith.constant 0 : index
    %c0_0 = arith.constant 0 : index
    %0 = vector.load %arg5[%c0, %c0_0] : memref<8x128xf32, #tpu.memory_space<vmem>>, vector<8x128xf32>
    %c0_1 = arith.constant 0 : index
    %c0_2 = arith.constant 0 : index
    %1 = vector.load %arg7[%c0_1, %c0_2] : memref<128x384xf32, #tpu.memory_space<vmem>>, vector<128x384xf32>
    %c0_3 = arith.constant 0 : index
    %c0_4 = arith.constant 0 : index
    %2 = vector.load %arg9[%c0_3, %c0_4] : memref<128x384xf32, #tpu.memory_space<vmem>>, vector<128x384xf32>
    %c0_5 = arith.constant 0 : index
    %c0_6 = arith.constant 0 : index
    %3 = vector.load %arg11[%c0_5, %c0_6] : memref<128x8xf32, #tpu.memory_space<vmem>>, vector<128x8xf32>
    %c0_7 = arith.constant 0 : index
    %c0_8 = arith.constant 0 : index
    %4 = vector.load %arg6[%c0_7, %c0_8] : memref<1x128xf32, #tpu.memory_space<vmem>>, vector<1x128xf32>
    %5 = vector.shape_cast %4 : vector<1x128xf32> to vector<1x128xf32>
    %6 = vector.broadcast %5 : vector<1x128xf32> to vector<8x128xf32>
    %c0_9 = arith.constant 0 : index
    %c0_10 = arith.constant 0 : index
    %7 = vector.load %arg8[%c0_9, %c0_10] : memref<1x384xf32, #tpu.memory_space<vmem>>, vector<1x384xf32>
    %8 = vector.shape_cast %7 : vector<1x384xf32> to vector<1x384xf32>
    %9 = vector.broadcast %8 : vector<1x384xf32> to vector<8x384xf32>
    %c0_11 = arith.constant 0 : index
    %c0_12 = arith.constant 0 : index
    %10 = vector.load %arg10[%c0_11, %c0_12] : memref<1x128xf32, #tpu.memory_space<vmem>>, vector<1x128xf32>
    %11 = vector.shape_cast %10 : vector<1x128xf32> to vector<1x128xf32>
    %12 = vector.broadcast %11 : vector<1x128xf32> to vector<8x128xf32>
    %c0_13 = arith.constant 0 : index
    %c0_14 = arith.constant 0 : index
    %13 = vector.load %arg12[%c0_13, %c0_14] : memref<1x8xf32, #tpu.memory_space<vmem>>, vector<1x8xf32>
    %14 = vector.shape_cast %13 : vector<1x8xf32> to vector<1x8xf32>
    %15 = vector.broadcast %14 : vector<1x8xf32> to vector<8x8xf32>
    %c0_15 = arith.constant 0 : index
    %c0_16 = arith.constant 0 : index
    %16 = vector.load %arg3[%c0_15, %c0_16] : memref<8x1xf32, #tpu.memory_space<vmem>>, vector<8x1xf32>
    %17 = vector.shape_cast %16 : vector<8x1xf32> to vector<8x1xf32>
    %18 = vector.broadcast %17 : vector<8x1xf32> to vector<8x8xf32>
    %cst = arith.constant 0.000000e+00 : f32
    %19 = vector.broadcast %cst : f32 to vector<8x128xf32>
    %c0_17 = arith.constant 0 : index
    %c0_18 = arith.constant 0 : index
    %c0_19 = arith.constant 0 : index
    %20 = vector.load %arg1[%c0_17, %c0_18, %c0_19] : memref<2x8x8xf32, #tpu.memory_space<vmem>>, vector<1x8x8xf32>
    %21 = vector.shape_cast %20 : vector<1x8x8xf32> to vector<8x8xf32>
    %cst_20 = arith.constant dense<0.000000e+00> : vector<8x128xf32>
    %22 = tpu.matmul %21, %0, %cst_20 {dimension_numbers = #tpu.dot_dimension_numbers<[1], [0], [0], [1], [0, 0, 1, 1], [], []>} : vector<8x8xf32>, vector<8x128xf32>, vector<8x128xf32> -> vector<8x128xf32>
    %23 = arith.addf %22, %6 : vector<8x128xf32>
    %cst_21 = arith.constant 0.000000e+00 : f32
    %24 = vector.broadcast %cst_21 : f32 to vector<8x128xf32>
    %25 = arith.maximumf %23, %24 : vector<8x128xf32>
    %cst_22 = arith.constant dense<0.000000e+00> : vector<8x384xf32>
    %26 = tpu.matmul %25, %1, %cst_22 {dimension_numbers = #tpu.dot_dimension_numbers<[1], [0], [0], [1], [0, 0, 1, 1], [], []>} : vector<8x128xf32>, vector<128x384xf32>, vector<8x384xf32> -> vector<8x384xf32>
    %27 = arith.addf %26, %9 : vector<8x384xf32>
    %cst_23 = arith.constant dense<0.000000e+00> : vector<8x384xf32>
    %28 = tpu.matmul %19, %2, %cst_23 {dimension_numbers = #tpu.dot_dimension_numbers<[1], [0], [0], [1], [0, 0, 1, 1], [], []>} : vector<8x128xf32>, vector<128x384xf32>, vector<8x384xf32> -> vector<8x384xf32>
    %29 = vector.extract_strided_slice %27 {offsets = [0, 0], sizes = [8, 128], strides = [1, 1]} : vector<8x384xf32> to vector<8x128xf32>
    %30 = vector.extract_strided_slice %28 {offsets = [0, 0], sizes = [8, 128], strides = [1, 1]} : vector<8x384xf32> to vector<8x128xf32>
    %31 = arith.addf %29, %30 : vector<8x128xf32>
    %32 = arith.negf %31 : vector<8x128xf32>
    %33 = math.exp %32 : vector<8x128xf32>
    %cst_24 = arith.constant 1.000000e+00 : f32
    %34 = vector.broadcast %cst_24 : f32 to vector<8x128xf32>
    %35 = arith.addf %34, %33 : vector<8x128xf32>
    %36 = arith.divf %34, %35 : vector<8x128xf32>
    %37 = vector.extract_strided_slice %27 {offsets = [0, 128], sizes = [8, 128], strides = [1, 1]} : vector<8x384xf32> to vector<8x128xf32>
    %38 = vector.extract_strided_slice %28 {offsets = [0, 128], sizes = [8, 128], strides = [1, 1]} : vector<8x384xf32> to vector<8x128xf32>
    %39 = arith.addf %37, %38 : vector<8x128xf32>
    %40 = arith.negf %39 : vector<8x128xf32>
    %41 = math.exp %40 : vector<8x128xf32>
    %cst_25 = arith.constant 1.000000e+00 : f32
    %42 = vector.broadcast %cst_25 : f32 to vector<8x128xf32>
    %43 = arith.addf %42, %41 : vector<8x128xf32>
    %44 = arith.divf %42, %43 : vector<8x128xf32>
    %45 = vector.extract_strided_slice %27 {offsets = [0, 256], sizes = [8, 128], strides = [1, 1]} : vector<8x384xf32> to vector<8x128xf32>
    %46 = vector.extract_strided_slice %28 {offsets = [0, 256], sizes = [8, 128], strides = [1, 1]} : vector<8x384xf32> to vector<8x128xf32>
    %47 = arith.addf %46, %12 : vector<8x128xf32>
    %48 = arith.mulf %36, %47 : vector<8x128xf32>
    %49 = arith.addf %45, %48 : vector<8x128xf32>
    %50 = math.tanh %49 : vector<8x128xf32>
    %cst_26 = arith.constant 1.000000e+00 : f32
    %51 = vector.broadcast %cst_26 : f32 to vector<8x128xf32>
    %52 = arith.subf %51, %44 : vector<8x128xf32>
    %53 = arith.mulf %52, %50 : vector<8x128xf32>
    %54 = arith.mulf %44, %19 : vector<8x128xf32>
    %55 = arith.addf %53, %54 : vector<8x128xf32>
    %c1 = arith.constant 1 : index
    %c0_27 = arith.constant 0 : index
    %c0_28 = arith.constant 0 : index
    %56 = vector.load %arg1[%c1, %c0_27, %c0_28] : memref<2x8x8xf32, #tpu.memory_space<vmem>>, vector<1x8x8xf32>
    %57 = vector.shape_cast %56 : vector<1x8x8xf32> to vector<8x8xf32>
    %cst_29 = arith.constant dense<0.000000e+00> : vector<8x128xf32>
    %58 = tpu.matmul %57, %0, %cst_29 {dimension_numbers = #tpu.dot_dimension_numbers<[1], [0], [0], [1], [0, 0, 1, 1], [], []>} : vector<8x8xf32>, vector<8x128xf32>, vector<8x128xf32> -> vector<8x128xf32>
    %59 = arith.addf %58, %6 : vector<8x128xf32>
    %cst_30 = arith.constant 0.000000e+00 : f32
    %60 = vector.broadcast %cst_30 : f32 to vector<8x128xf32>
    %61 = arith.maximumf %59, %60 : vector<8x128xf32>
    %cst_31 = arith.constant dense<0.000000e+00> : vector<8x384xf32>
    %62 = tpu.matmul %61, %1, %cst_31 {dimension_numbers = #tpu.dot_dimension_numbers<[1], [0], [0], [1], [0, 0, 1, 1], [], []>} : vector<8x128xf32>, vector<128x384xf32>, vector<8x384xf32> -> vector<8x384xf32>
    %63 = arith.addf %62, %9 : vector<8x384xf32>
    %cst_32 = arith.constant dense<0.000000e+00> : vector<8x384xf32>
    %64 = tpu.matmul %55, %2, %cst_32 {dimension_numbers = #tpu.dot_dimension_numbers<[1], [0], [0], [1], [0, 0, 1, 1], [], []>} : vector<8x128xf32>, vector<128x384xf32>, vector<8x384xf32> -> vector<8x384xf32>
    %65 = vector.extract_strided_slice %63 {offsets = [0, 0], sizes = [8, 128], strides = [1, 1]} : vector<8x384xf32> to vector<8x128xf32>
    %66 = vector.extract_strided_slice %64 {offsets = [0, 0], sizes = [8, 128], strides = [1, 1]} : vector<8x384xf32> to vector<8x128xf32>
    %67 = arith.addf %65, %66 : vector<8x128xf32>
    %68 = arith.negf %67 : vector<8x128xf32>
    %69 = math.exp %68 : vector<8x128xf32>
    %cst_33 = arith.constant 1.000000e+00 : f32
    %70 = vector.broadcast %cst_33 : f32 to vector<8x128xf32>
    %71 = arith.addf %70, %69 : vector<8x128xf32>
    %72 = arith.divf %70, %71 : vector<8x128xf32>
    %73 = vector.extract_strided_slice %63 {offsets = [0, 128], sizes = [8, 128], strides = [1, 1]} : vector<8x384xf32> to vector<8x128xf32>
    %74 = vector.extract_strided_slice %64 {offsets = [0, 128], sizes = [8, 128], strides = [1, 1]} : vector<8x384xf32> to vector<8x128xf32>
    %75 = arith.addf %73, %74 : vector<8x128xf32>
    %76 = arith.negf %75 : vector<8x128xf32>
    %77 = math.exp %76 : vector<8x128xf32>
    %cst_34 = arith.constant 1.000000e+00 : f32
    %78 = vector.broadcast %cst_34 : f32 to vector<8x128xf32>
    %79 = arith.addf %78, %77 : vector<8x128xf32>
    %80 = arith.divf %78, %79 : vector<8x128xf32>
    %81 = vector.extract_strided_slice %63 {offsets = [0, 256], sizes = [8, 128], strides = [1, 1]} : vector<8x384xf32> to vector<8x128xf32>
    %82 = vector.extract_strided_slice %64 {offsets = [0, 256], sizes = [8, 128], strides = [1, 1]} : vector<8x384xf32> to vector<8x128xf32>
    %83 = arith.addf %82, %12 : vector<8x128xf32>
    %84 = arith.mulf %72, %83 : vector<8x128xf32>
    %85 = arith.addf %81, %84 : vector<8x128xf32>
    %86 = math.tanh %85 : vector<8x128xf32>
    %cst_35 = arith.constant 1.000000e+00 : f32
    %87 = vector.broadcast %cst_35 : f32 to vector<8x128xf32>
    %88 = arith.subf %87, %80 : vector<8x128xf32>
    %89 = arith.mulf %88, %86 : vector<8x128xf32>
    %90 = arith.mulf %80, %55 : vector<8x128xf32>
    %91 = arith.addf %89, %90 : vector<8x128xf32>
    %cst_36 = arith.constant dense<0.000000e+00> : vector<8x384xf32>
    %92 = tpu.matmul %91, %2, %cst_36 {dimension_numbers = #tpu.dot_dimension_numbers<[1], [0], [0], [1], [0, 0, 1, 1], [], []>} : vector<8x128xf32>, vector<128x384xf32>, vector<8x384xf32> -> vector<8x384xf32>
    %93 = vector.extract_strided_slice %92 {offsets = [0, 0], sizes = [8, 128], strides = [1, 1]} : vector<8x384xf32> to vector<8x128xf32>
    %94 = vector.extract_strided_slice %92 {offsets = [0, 128], sizes = [8, 128], strides = [1, 1]} : vector<8x384xf32> to vector<8x128xf32>
    %95 = vector.extract_strided_slice %92 {offsets = [0, 256], sizes = [8, 128], strides = [1, 1]} : vector<8x384xf32> to vector<8x128xf32>
    %96 = arith.addf %95, %12 : vector<8x128xf32>
    %c0_37 = arith.constant 0 : index
    %c0_38 = arith.constant 0 : index
    %c0_39 = arith.constant 0 : index
    %97 = vector.load %arg4[%c0_37, %c0_38, %c0_39] : memref<2x8x384xf32, #tpu.memory_space<vmem>>, vector<1x8x384xf32>
    %98 = vector.shape_cast %97 : vector<1x8x384xf32> to vector<8x384xf32>
    %99 = vector.extract_strided_slice %98 {offsets = [0, 0], sizes = [8, 128], strides = [1, 1]} : vector<8x384xf32> to vector<8x128xf32>
    %100 = arith.addf %99, %93 : vector<8x128xf32>
    %101 = arith.negf %100 : vector<8x128xf32>
    %102 = math.exp %101 : vector<8x128xf32>
    %cst_40 = arith.constant 1.000000e+00 : f32
    %103 = vector.broadcast %cst_40 : f32 to vector<8x128xf32>
    %104 = arith.addf %103, %102 : vector<8x128xf32>
    %105 = arith.divf %103, %104 : vector<8x128xf32>
    %106 = vector.extract_strided_slice %98 {offsets = [0, 128], sizes = [8, 128], strides = [1, 1]} : vector<8x384xf32> to vector<8x128xf32>
    %107 = arith.addf %106, %94 : vector<8x128xf32>
    %108 = arith.negf %107 : vector<8x128xf32>
    %109 = math.exp %108 : vector<8x128xf32>
    %cst_41 = arith.constant 1.000000e+00 : f32
    %110 = vector.broadcast %cst_41 : f32 to vector<8x128xf32>
    %111 = arith.addf %110, %109 : vector<8x128xf32>
    %112 = arith.divf %110, %111 : vector<8x128xf32>
    %113 = vector.extract_strided_slice %98 {offsets = [0, 256], sizes = [8, 128], strides = [1, 1]} : vector<8x384xf32> to vector<8x128xf32>
    %114 = arith.mulf %105, %96 : vector<8x128xf32>
    %115 = arith.addf %113, %114 : vector<8x128xf32>
    %116 = math.tanh %115 : vector<8x128xf32>
    %cst_42 = arith.constant 1.000000e+00 : f32
    %117 = vector.broadcast %cst_42 : f32 to vector<8x128xf32>
    %118 = arith.subf %117, %112 : vector<8x128xf32>
    %119 = arith.mulf %118, %116 : vector<8x128xf32>
    %120 = arith.mulf %112, %91 : vector<8x128xf32>
    %121 = arith.addf %119, %120 : vector<8x128xf32>
    %cst_43 = arith.constant dense<0.000000e+00> : vector<8x8xf32>
    %122 = tpu.matmul %121, %3, %cst_43 {dimension_numbers = #tpu.dot_dimension_numbers<[1], [0], [0], [1], [0, 0, 1, 1], [], []>} : vector<8x128xf32>, vector<128x8xf32>, vector<8x8xf32> -> vector<8x8xf32>
    %123 = arith.addf %122, %15 : vector<8x8xf32>
    %124 = arith.addf %123, %18 : vector<8x8xf32>
    %c0_44 = arith.constant 0 : index
    %c0_45 = arith.constant 0 : index
    %c0_46 = arith.constant 0 : index
    %125 = vector.load %arg1[%c0_44, %c0_45, %c0_46] : memref<2x8x8xf32, #tpu.memory_space<vmem>>, vector<1x8x8xf32>
    %126 = vector.shape_cast %125 : vector<1x8x8xf32> to vector<8x8xf32>
    %127 = arith.addf %126, %18 : vector<8x8xf32>
    %c0_47 = arith.constant 0 : index
    %c0_48 = arith.constant 0 : index
    %c0_49 = arith.constant 0 : index
    %128 = vector.load %arg2[%c0_47, %c0_48, %c0_49] : memref<2x8x8xf32, #tpu.memory_space<vmem>>, vector<1x8x8xf32>
    %129 = vector.shape_cast %128 : vector<1x8x8xf32> to vector<8x8xf32>
    %c0_50 = arith.constant 0 : index
    %c0_51 = arith.constant 0 : index
    %c0_52 = arith.constant 0 : index
    %130 = vector.load %arg13[%c0_50, %c0_51, %c0_52] : memref<2x8x8xf32, #tpu.memory_space<vmem>>, vector<1x8x8xf32>
    %131 = vector.shape_cast %130 : vector<1x8x8xf32> to vector<8x8xf32>
    %132 = vector.shape_cast %124 : vector<8x8xf32> to vector<1x8x8xf32>
    tpu.vector_store %arg13[%c0_50, %c0_51, %c0_52], %132 {strides = array<i32>} : memref<2x8x8xf32, #tpu.memory_space<vmem>>, vector<1x8x8xf32>,
    %133 = arith.mulf %129, %127 : vector<8x8xf32>
    %cst_53 = arith.constant 1.000000e+00 : f32
    %134 = vector.broadcast %cst_53 : f32 to vector<8x8xf32>
    %135 = arith.subf %134, %129 : vector<8x8xf32>
    %136 = arith.mulf %135, %124 : vector<8x8xf32>
    %137 = arith.addf %133, %136 : vector<8x8xf32>
    %c0_54 = arith.constant 0 : index
    %c0_55 = arith.constant 0 : index
    %c0_56 = arith.constant 0 : index
    %138 = vector.load %arg14[%c0_54, %c0_55, %c0_56] : memref<2x8x8xf32, #tpu.memory_space<vmem>>, vector<1x8x8xf32>
    %139 = vector.shape_cast %138 : vector<1x8x8xf32> to vector<8x8xf32>
    %140 = vector.shape_cast %137 : vector<8x8xf32> to vector<1x8x8xf32>
    tpu.vector_store %arg14[%c0_54, %c0_55, %c0_56], %140 {strides = array<i32>} : memref<2x8x8xf32, #tpu.memory_space<vmem>>, vector<1x8x8xf32>,
    %c1_57 = arith.constant 1 : index
    %c0_58 = arith.constant 0 : index
    %c0_59 = arith.constant 0 : index
    %141 = vector.load %arg4[%c1_57, %c0_58, %c0_59] : memref<2x8x384xf32, #tpu.memory_space<vmem>>, vector<1x8x384xf32>
    %142 = vector.shape_cast %141 : vector<1x8x384xf32> to vector<8x384xf32>
    %143 = vector.extract_strided_slice %142 {offsets = [0, 0], sizes = [8, 128], strides = [1, 1]} : vector<8x384xf32> to vector<8x128xf32>
    %144 = arith.addf %143, %93 : vector<8x128xf32>
    %145 = arith.negf %144 : vector<8x128xf32>
    %146 = math.exp %145 : vector<8x128xf32>
    %cst_60 = arith.constant 1.000000e+00 : f32
    %147 = vector.broadcast %cst_60 : f32 to vector<8x128xf32>
    %148 = arith.addf %147, %146 : vector<8x128xf32>
    %149 = arith.divf %147, %148 : vector<8x128xf32>
    %150 = vector.extract_strided_slice %142 {offsets = [0, 128], sizes = [8, 128], strides = [1, 1]} : vector<8x384xf32> to vector<8x128xf32>
    %151 = arith.addf %150, %94 : vector<8x128xf32>
    %152 = arith.negf %151 : vector<8x128xf32>
    %153 = math.exp %152 : vector<8x128xf32>
    %cst_61 = arith.constant 1.000000e+00 : f32
    %154 = vector.broadcast %cst_61 : f32 to vector<8x128xf32>
    %155 = arith.addf %154, %153 : vector<8x128xf32>
    %156 = arith.divf %154, %155 : vector<8x128xf32>
    %157 = vector.extract_strided_slice %142 {offsets = [0, 256], sizes = [8, 128], strides = [1, 1]} : vector<8x384xf32> to vector<8x128xf32>
    %158 = arith.mulf %149, %96 : vector<8x128xf32>
    %159 = arith.addf %157, %158 : vector<8x128xf32>
    %160 = math.tanh %159 : vector<8x128xf32>
    %cst_62 = arith.constant 1.000000e+00 : f32
    %161 = vector.broadcast %cst_62 : f32 to vector<8x128xf32>
    %162 = arith.subf %161, %156 : vector<8x128xf32>
    %163 = arith.mulf %162, %160 : vector<8x128xf32>
    %164 = arith.mulf %156, %91 : vector<8x128xf32>
    %165 = arith.addf %163, %164 : vector<8x128xf32>
    %cst_63 = arith.constant dense<0.000000e+00> : vector<8x8xf32>
    %166 = tpu.matmul %165, %3, %cst_63 {dimension_numbers = #tpu.dot_dimension_numbers<[1], [0], [0], [1], [0, 0, 1, 1], [], []>} : vector<8x128xf32>, vector<128x8xf32>, vector<8x8xf32> -> vector<8x8xf32>
    %167 = arith.addf %166, %15 : vector<8x8xf32>
    %168 = arith.addf %167, %18 : vector<8x8xf32>
    %c1_64 = arith.constant 1 : index
    %c0_65 = arith.constant 0 : index
    %c0_66 = arith.constant 0 : index
    %169 = vector.load %arg1[%c1_64, %c0_65, %c0_66] : memref<2x8x8xf32, #tpu.memory_space<vmem>>, vector<1x8x8xf32>
    %170 = vector.shape_cast %169 : vector<1x8x8xf32> to vector<8x8xf32>
    %171 = arith.addf %170, %18 : vector<8x8xf32>
    %c1_67 = arith.constant 1 : index
    %c0_68 = arith.constant 0 : index
    %c0_69 = arith.constant 0 : index
    %172 = vector.load %arg2[%c1_67, %c0_68, %c0_69] : memref<2x8x8xf32, #tpu.memory_space<vmem>>, vector<1x8x8xf32>
    %173 = vector.shape_cast %172 : vector<1x8x8xf32> to vector<8x8xf32>
    %c1_70 = arith.constant 1 : index
    %c0_71 = arith.constant 0 : index
    %c0_72 = arith.constant 0 : index
    %174 = vector.load %arg13[%c1_70, %c0_71, %c0_72] : memref<2x8x8xf32, #tpu.memory_space<vmem>>, vector<1x8x8xf32>
    %175 = vector.shape_cast %174 : vector<1x8x8xf32> to vector<8x8xf32>
    %176 = vector.shape_cast %168 : vector<8x8xf32> to vector<1x8x8xf32>
    tpu.vector_store %arg13[%c1_70, %c0_71, %c0_72], %176 {strides = array<i32>} : memref<2x8x8xf32, #tpu.memory_space<vmem>>, vector<1x8x8xf32>,
    %177 = arith.mulf %173, %171 : vector<8x8xf32>
    %cst_73 = arith.constant 1.000000e+00 : f32
    %178 = vector.broadcast %cst_73 : f32 to vector<8x8xf32>
    %179 = arith.subf %178, %173 : vector<8x8xf32>
    %180 = arith.mulf %179, %168 : vector<8x8xf32>
    %181 = arith.addf %177, %180 : vector<8x8xf32>
    %c1_74 = arith.constant 1 : index
    %c0_75 = arith.constant 0 : index
    %c0_76 = arith.constant 0 : index
    %182 = vector.load %arg14[%c1_74, %c0_75, %c0_76] : memref<2x8x8xf32, #tpu.memory_space<vmem>>, vector<1x8x8xf32>
    %183 = vector.shape_cast %182 : vector<1x8x8xf32> to vector<8x8xf32>
    %184 = vector.shape_cast %181 : vector<8x8xf32> to vector<1x8x8xf32>
    tpu.vector_store %arg14[%c1_74, %c0_75, %c0_76], %184 {strides = array<i32>} : memref<2x8x8xf32, #tpu.memory_space<vmem>>, vector<1x8x8xf32>,
    return
  }
  func.func @transform_0(%arg0: i32) -> (i32, i32, i32) {
    %c0_i32 = arith.constant 0 : i32
    %c0_i32_0 = arith.constant 0 : i32
    %c0_i32_1 = arith.constant 0 : i32
    return %c0_i32, %arg0, %c0_i32_0 : i32, i32, i32
  }
  func.func @transform_1(%arg0: i32) -> (i32, i32, i32) {
    %c0_i32 = arith.constant 0 : i32
    %c0_i32_0 = arith.constant 0 : i32
    %c0_i32_1 = arith.constant 0 : i32
    return %c0_i32, %arg0, %c0_i32_0 : i32, i32, i32
  }
  func.func @transform_2(%arg0: i32) -> (i32, i32) {
    %c0_i32 = arith.constant 0 : i32
    %c0_i32_0 = arith.constant 0 : i32
    return %arg0, %c0_i32 : i32, i32
  }
  func.func @transform_3(%arg0: i32) -> (i32, i32, i32) {
    %c0_i32 = arith.constant 0 : i32
    %c0_i32_0 = arith.constant 0 : i32
    %c0_i32_1 = arith.constant 0 : i32
    %c0_i32_2 = arith.constant 0 : i32
    return %c0_i32, %c0_i32_0, %c0_i32_1 : i32, i32, i32
  }
  func.func @transform_4(%arg0: i32) -> (i32, i32) {
    %c0_i32 = arith.constant 0 : i32
    %c0_i32_0 = arith.constant 0 : i32
    %c0_i32_1 = arith.constant 0 : i32
    return %c0_i32, %c0_i32_0 : i32, i32
  }
  func.func @transform_5(%arg0: i32) -> (i32, i32) {
    %c0_i32 = arith.constant 0 : i32
    %c0_i32_0 = arith.constant 0 : i32
    %c0_i32_1 = arith.constant 0 : i32
    return %c0_i32, %c0_i32_0 : i32, i32
  }
  func.func @transform_6(%arg0: i32) -> (i32, i32) {
    %c0_i32 = arith.constant 0 : i32
    %c0_i32_0 = arith.constant 0 : i32
    %c0_i32_1 = arith.constant 0 : i32
    return %c0_i32, %c0_i32_0 : i32, i32
  }
  func.func @transform_7(%arg0: i32) -> (i32, i32) {
    %c0_i32 = arith.constant 0 : i32
    %c0_i32_0 = arith.constant 0 : i32
    %c0_i32_1 = arith.constant 0 : i32
    return %c0_i32, %c0_i32_0 : i32, i32
  }
  func.func @transform_8(%arg0: i32) -> (i32, i32) {
    %c0_i32 = arith.constant 0 : i32
    %c0_i32_0 = arith.constant 0 : i32
    %c0_i32_1 = arith.constant 0 : i32
    return %c0_i32, %c0_i32_0 : i32, i32
  }
  func.func @transform_9(%arg0: i32) -> (i32, i32) {
    %c0_i32 = arith.constant 0 : i32
    %c0_i32_0 = arith.constant 0 : i32
    %c0_i32_1 = arith.constant 0 : i32
    return %c0_i32, %c0_i32_0 : i32, i32
  }
  func.func @transform_10(%arg0: i32) -> (i32, i32) {
    %c0_i32 = arith.constant 0 : i32
    %c0_i32_0 = arith.constant 0 : i32
    %c0_i32_1 = arith.constant 0 : i32
    return %c0_i32, %c0_i32_0 : i32, i32
  }
  func.func @transform_11(%arg0: i32) -> (i32, i32) {
    %c0_i32 = arith.constant 0 : i32
    %c0_i32_0 = arith.constant 0 : i32
    %c0_i32_1 = arith.constant 0 : i32
    return %c0_i32, %c0_i32_0 : i32, i32
  }
  func.func @transform_12(%arg0: i32) -> (i32, i32, i32) {
    %c0_i32 = arith.constant 0 : i32
    %c0_i32_0 = arith.constant 0 : i32
    %c0_i32_1 = arith.constant 0 : i32
    return %c0_i32, %arg0, %c0_i32_0 : i32, i32, i32
  }
  func.func @transform_13(%arg0: i32) -> (i32, i32, i32) {
    %c0_i32 = arith.constant 0 : i32
    %c0_i32_0 = arith.constant 0 : i32
    %c0_i32_1 = arith.constant 0 : i32
    return %c0_i32, %arg0, %c0_i32_0 : i32, i32, i32
  }
}

</mosaic_0001>

<llo_original>
// kernel: tpu_custom_call.1
$region0: #{tpu_custom_call.1}
  #allocation0 [shape = 'u32[]', space=smem, size = 0x4, offset = 0x4, fixed_abs, tag = 'smem constant byte address 0x4 - core index']
  #allocation1 [shape = 'u32[144,128]{1,0:T(1,128)}', space=vmem, size = 0x12000, scoped, tag = 'internal scratch']
  %s0 = inlined_call_operand.vmem [shape: f32[2,16,8], index: 0, kind: input, shape index: {}]
  %s1 = inlined_call_operand.vmem [shape: f32[2,16,8], index: 1, kind: input, shape index: {}]
  %s2 = inlined_call_operand.vmem [shape: f32[16,1], index: 2, kind: input, shape index: {}]
  %s3 = inlined_call_operand.vmem [shape: f32[2,8,384], index: 3, kind: input, shape index: {}]
  %s4 = inlined_call_operand.vmem [shape: f32[8,128], index: 4, kind: input, shape index: {}]
  %s5 = inlined_call_operand.vmem [shape: f32[1,128], index: 5, kind: input, shape index: {}]
  %s6 = inlined_call_operand.hbm [shape: f32[128,384], index: 6, kind: input, shape index: {}]
  %s7 = inlined_call_operand.vmem [shape: f32[1,384], index: 7, kind: input, shape index: {}]
  %s8 = inlined_call_operand.hbm [shape: f32[128,384], index: 8, kind: input, shape index: {}]
  %s9 = inlined_call_operand.vmem [shape: f32[1,128], index: 9, kind: input, shape index: {}]
  %s10 = inlined_call_operand.vmem [shape: f32[128,8], index: 10, kind: input, shape index: {}]
  %s11 = inlined_call_operand.vmem [shape: f32[1,8], index: 11, kind: input, shape index: {}]
  %s12 = inlined_call_operand.vmem [shape: f32[2,16,8], index: 12, kind: output, shape index: {0}]
  %s13 = inlined_call_operand.vmem [shape: f32[2,16,8], index: 13, kind: output, shape index: {1}]
  %14 = xla_tuple %s12, %s13
  %s15 = sld [smem:[#allocation0]]
  $region241: #{tpu_custom_call.1} parent=0
    _
  %s17 = ssub.s32 1, %s15
  %s18 = scalar_select 0, %s17, %s15
  $region1: #{tpu_custom_call.1} parent=0
    #allocation2 [shape = 'u8[16384]{0}', space=vmem, size = 0x4000, scoped, tag = 'input window, operand 0']
    #allocation3 [shape = 'u8[16384]{0}', space=vmem, size = 0x4000, scoped, tag = 'input window, operand 1']
    #allocation4 [shape = 'u8[196608]{0}', space=vmem, size = 0x30000, scoped, tag = 'input window, operand 6, single buffered']
    #allocation5 [shape = 's32[2]{0}', space=sflag, size = 0x8, scoped, tag = 'scoped memory for tpu_custom_call.1']
    #allocation6 [shape = 'u8[196608]{0}', space=vmem, size = 0x30000, scoped, tag = 'input window, operand 8, single buffered']
    #allocation7 [shape = 's32[1]{0}', space=sflag, size = 0x4, scoped, tag = 'scoped memory for tpu_custom_call.1']
    #allocation8 [shape = 'u8[16384]{0}', space=vmem, size = 0x4000, scoped, tag = 'output window, operand 0']
    #allocation9 [shape = 'u8[16384]{0}', space=vmem, size = 0x4000, scoped, tag = 'output window, operand 1']
    %19 = vsyncpa [#allocation5], 0
    %20 = vsyncpa [#allocation7], 0
    loop: start=0, step=1, limit=4
    $region2: #{tpu_custom_call.1} parent=1 // loop_pre_header
      _
    $region3: #{tpu_custom_call.1} parent=1 // loop_header
      %s22 = sphi 0, %s26
      %p23 = scmp.ge.s32.totalorder %s22, 4
      %s32 = sphi 0, %s34
      %s35 = sphi 0, %s32
      %s36 = sphi 0, %s35
      %s52 = sphi 0, %s36
      %s58 = sphi 0, %s60
      %s61 = sphi 0, %s58
      %s62 = sphi 0, %s61
      %s78 = sphi 0, %s62
      %s84 = sphi 0, %s86
      %s87 = sphi 0, %s84
      %s88 = sphi 0, %s87
      %s104 = sphi 0, %s88
      %s108 = sphi 0, %s108
      %s110 = sphi 0, %s108
      %s111 = sphi 0, %s110
      %s125 = sphi 0, %s111
      %s129 = sphi 0, %s129
      %s131 = sphi 0, %s129
      %s132 = sphi 0, %s131
      %s146 = sphi 0, %s132
      %s150 = sphi 0, %s150
      %s152 = sphi 0, %s150
      %s153 = sphi 0, %s152
      %s167 = sphi 0, %s153
      %s171 = sphi 0, %s171
      %s173 = sphi 0, %s171
      %s174 = sphi 0, %s173
      %s188 = sphi 0, %s174
      %s192 = sphi 0, %s192
      %s194 = sphi 0, %s192
      %s195 = sphi 0, %s194
      %s209 = sphi 0, %s195
      %s213 = sphi 0, %s213
      %s215 = sphi 0, %s213
      %s216 = sphi 0, %s215
      %s230 = sphi 0, %s216
      %s234 = sphi 0, %s234
      %s236 = sphi 0, %s234
      %s237 = sphi 0, %s236
      %s251 = sphi 0, %s237
      %s255 = sphi 0, %s255
      %s257 = sphi 0, %s255
      %s258 = sphi 0, %s257
      %s272 = sphi 0, %s258
      %s276 = sphi 0, %s276
      %s278 = sphi 0, %s276
      %s279 = sphi 0, %s278
      %s293 = sphi 0, %s279
      %s299 = sphi 0, %s301
      %s302 = sphi 0, %s299
      %s303 = sphi 0, %s302
      %s319 = sphi 0, %s303
      %s325 = sphi 0, %s327
      %s328 = sphi 0, %s325
      %s329 = sphi 0, %s328
      %s345 = sphi 0, %s329
    $region4: #{tpu_custom_call.1} parent=1 // loop_header_branch
      %25 = sbr.rel (%p23) target = $region8
    $region5: #{tpu_custom_call.1} parent=1 // loop_body
      %s27 = ssub.s32 %s22, 1
      %s28 = ssub.s32 %s22, 2
      %s29 = sadd.s32 %s22, 1
      %s30 = ssub.s32 %s22, %s29
      %p31 = scmp.eq.s32.totalorder %s30, 0
      %s33 = sadd.s32 %s32, 1
      %s34 = scalar_select %p31, %s32, %s33
      %p37 = pneg %p31
      %p38 = scmp.eq.s32.totalorder %s22, 1
      %p39 = por %p37, %p38
      %p40 = scmp.ne.s32.totalorder %s32, %s35
      %p41 = scmp.eq.s32.totalorder %s22, 0
      %p42 = por %p40, %p41
      %p43 = scmp.ne.s32.totalorder %s32, %s35
      %p44 = scmp.eq.s32.totalorder %s27, 1
      %p45 = por %p43, %p44
      %p46 = scmp.ne.s32.totalorder %s35, %s36
      %p47 = scmp.eq.s32.totalorder %s27, 0
      %p48 = por %p46, %p47
      %p49 = scmp.ne.s32.totalorder %s35, %s36
      %p50 = scmp.eq.s32.totalorder %s28, 1
      %p51 = por %p49, %p50
      %p53 = scmp.ne.s32.totalorder %s36, %s52
      %p54 = scmp.eq.s32.totalorder %s28, 0
      %p55 = por %p53, %p54
      %s56 = ssub.s32 %s22, %s29
      %p57 = scmp.eq.s32.totalorder %s56, 0
      %s59 = sadd.s32 %s58, 1
      %s60 = scalar_select %p57, %s58, %s59
      %p63 = pneg %p57
      %p64 = scmp.eq.s32.totalorder %s22, 1
      %p65 = por %p63, %p64
      %p66 = scmp.ne.s32.totalorder %s58, %s61
      %p67 = scmp.eq.s32.totalorder %s22, 0
      %p68 = por %p66, %p67
      %p69 = scmp.ne.s32.totalorder %s58, %s61
      %p70 = scmp.eq.s32.totalorder %s27, 1
      %p71 = por %p69, %p70
      %p72 = scmp.ne.s32.totalorder %s61, %s62
      %p73 = scmp.eq.s32.totalorder %s27, 0
      %p74 = por %p72, %p73
      %p75 = scmp.ne.s32.totalorder %s61, %s62
      %p76 = scmp.eq.s32.totalorder %s28, 1
      %p77 = por %p75, %p76
      %p79 = scmp.ne.s32.totalorder %s62, %s78
      %p80 = scmp.eq.s32.totalorder %s28, 0
      %p81 = por %p79, %p80
      %s82 = ssub.s32 %s22, %s29
      %p83 = scmp.eq.s32.totalorder %s82, 0
      %s85 = sadd.s32 %s84, 1
      %s86 = scalar_select %p83, %s84, %s85
      %p89 = pneg %p83
      %p90 = scmp.eq.s32.totalorder %s22, 1
      %p91 = por %p89, %p90
      %p92 = scmp.ne.s32.totalorder %s84, %s87
      %p93 = scmp.eq.s32.totalorder %s22, 0
      %p94 = por %p92, %p93
      %p95 = scmp.ne.s32.totalorder %s84, %s87
      %p96 = scmp.eq.s32.totalorder %s27, 1
      %p97 = por %p95, %p96
      %p98 = scmp.ne.s32.totalorder %s87, %s88
      %p99 = scmp.eq.s32.totalorder %s27, 0
      %p100 = por %p98, %p99
      %p101 = scmp.ne.s32.totalorder %s87, %s88
      %p102 = scmp.eq.s32.totalorder %s28, 1
      %p103 = por %p101, %p102
      %p105 = scmp.ne.s32.totalorder %s88, %s104
      %p106 = scmp.eq.s32.totalorder %s28, 0
      %p107 = por %p105, %p106
      %s109 = sadd.s32 %s108, 1
      %p112 = scmp.eq.s32.totalorder %s22, 1
      %p113 = scmp.ne.s32.totalorder %s108, %s110
      %p114 = scmp.eq.s32.totalorder %s22, 0
      %p115 = por %p113, %p114
      %p116 = scmp.ne.s32.totalorder %s108, %s110
      %p117 = scmp.eq.s32.totalorder %s27, 1
      %p118 = por %p116, %p117
      %p119 = scmp.ne.s32.totalorder %s110, %s111
      %p120 = scmp.eq.s32.totalorder %s27, 0
      %p121 = por %p119, %p120
      %p122 = scmp.ne.s32.totalorder %s110, %s111
      %p123 = scmp.eq.s32.totalorder %s28, 1
      %p124 = por %p122, %p123
      %p126 = scmp.ne.s32.totalorder %s111, %s125
      %p127 = scmp.eq.s32.totalorder %s28, 0
      %p128 = por %p126, %p127
      %s130 = sadd.s32 %s129, 1
      %p133 = scmp.eq.s32.totalorder %s22, 1
      %p134 = scmp.ne.s32.totalorder %s129, %s131
      %p135 = scmp.eq.s32.totalorder %s22, 0
      %p136 = por %p134, %p135
      %p137 = scmp.ne.s32.totalorder %s129, %s131
      %p138 = scmp.eq.s32.totalorder %s27, 1
      %p139 = por %p137, %p138
      %p140 = scmp.ne.s32.totalorder %s131, %s132
      %p141 = scmp.eq.s32.totalorder %s27, 0
      %p142 = por %p140, %p141
      %p143 = scmp.ne.s32.totalorder %s131, %s132
      %p144 = scmp.eq.s32.totalorder %s28, 1
      %p145 = por %p143, %p144
      %p147 = scmp.ne.s32.totalorder %s132, %s146
      %p148 = scmp.eq.s32.totalorder %s28, 0
      %p149 = por %p147, %p148
      %s151 = sadd.s32 %s150, 1
      %p154 = scmp.eq.s32.totalorder %s22, 1
      %p155 = scmp.ne.s32.totalorder %s150, %s152
      %p156 = scmp.eq.s32.totalorder %s22, 0
      %p157 = por %p155, %p156
      %p158 = scmp.ne.s32.totalorder %s150, %s152
      %p159 = scmp.eq.s32.totalorder %s27, 1
      %p160 = por %p158, %p159
      %p161 = scmp.ne.s32.totalorder %s152, %s153
      %p162 = scmp.eq.s32.totalorder %s27, 0
      %p163 = por %p161, %p162
      %p164 = scmp.ne.s32.totalorder %s152, %s153
      %p165 = scmp.eq.s32.totalorder %s28, 1
      %p166 = por %p164, %p165
      %p168 = scmp.ne.s32.totalorder %s153, %s167
      %p169 = scmp.eq.s32.totalorder %s28, 0
      %p170 = por %p168, %p169
      %s172 = sadd.s32 %s171, 1
      %p175 = scmp.eq.s32.totalorder %s22, 1
      %p176 = scmp.ne.s32.totalorder %s171, %s173
      %p177 = scmp.eq.s32.totalorder %s22, 0
      %p178 = por %p176, %p177
      %p179 = scmp.ne.s32.totalorder %s171, %s173
      %p180 = scmp.eq.s32.totalorder %s27, 1
      %p181 = por %p179, %p180
      %p182 = scmp.ne.s32.totalorder %s173, %s174
      %p183 = scmp.eq.s32.totalorder %s27, 0
      %p184 = por %p182, %p183
      %p185 = scmp.ne.s32.totalorder %s173, %s174
      %p186 = scmp.eq.s32.totalorder %s28, 1
      %p187 = por %p185, %p186
      %p189 = scmp.ne.s32.totalorder %s174, %s188
      %p190 = scmp.eq.s32.totalorder %s28, 0
      %p191 = por %p189, %p190
      %s193 = sadd.s32 %s192, 1
      %p196 = scmp.eq.s32.totalorder %s22, 1
      %p197 = scmp.ne.s32.totalorder %s192, %s194
      %p198 = scmp.eq.s32.totalorder %s22, 0
      %p199 = por %p197, %p198
      %p200 = scmp.ne.s32.totalorder %s192, %s194
      %p201 = scmp.eq.s32.totalorder %s27, 1
      %p202 = por %p200, %p201
      %p203 = scmp.ne.s32.totalorder %s194, %s195
      %p204 = scmp.eq.s32.totalorder %s27, 0
      %p205 = por %p203, %p204
      %p206 = scmp.ne.s32.totalorder %s194, %s195
      %p207 = scmp.eq.s32.totalorder %s28, 1
      %p208 = por %p206, %p207
      %p210 = scmp.ne.s32.totalorder %s195, %s209
      %p211 = scmp.eq.s32.totalorder %s28, 0
      %p212 = por %p210, %p211
      %s214 = sadd.s32 %s213, 1
      %p217 = scmp.eq.s32.totalorder %s22, 1
      %p218 = scmp.ne.s32.totalorder %s213, %s215
      %p219 = scmp.eq.s32.totalorder %s22, 0
      %p220 = por %p218, %p219
      %p221 = scmp.ne.s32.totalorder %s213, %s215
      %p222 = scmp.eq.s32.totalorder %s27, 1
      %p223 = por %p221, %p222
      %p224 = scmp.ne.s32.totalorder %s215, %s216
      %p225 = scmp.eq.s32.totalorder %s27, 0
      %p226 = por %p224, %p225
      %p227 = scmp.ne.s32.totalorder %s215, %s216
      %p228 = scmp.eq.s32.totalorder %s28, 1
      %p229 = por %p227, %p228
      %p231 = scmp.ne.s32.totalorder %s216, %s230
      %p232 = scmp.eq.s32.totalorder %s28, 0
      %p233 = por %p231, %p232
      %s235 = sadd.s32 %s234, 1
      %p238 = scmp.eq.s32.totalorder %s22, 1
      %p239 = scmp.ne.s32.totalorder %s234, %s236
      %p240 = scmp.eq.s32.totalorder %s22, 0
      %p241 = por %p239, %p240
      %p242 = scmp.ne.s32.totalorder %s234, %s236
      %p243 = scmp.eq.s32.totalorder %s27, 1
      %p244 = por %p242, %p243
      %p245 = scmp.ne.s32.totalorder %s236, %s237
      %p246 = scmp.eq.s32.totalorder %s27, 0
      %p247 = por %p245, %p246
      %p248 = scmp.ne.s32.totalorder %s236, %s237
      %p249 = scmp.eq.s32.totalorder %s28, 1
      %p250 = por %p248, %p249
      %p252 = scmp.ne.s32.totalorder %s237, %s251
      %p253 = scmp.eq.s32.totalorder %s28, 0
      %p254 = por %p252, %p253
      %s256 = sadd.s32 %s255, 1
      %p259 = scmp.eq.s32.totalorder %s22, 1
      %p260 = scmp.ne.s32.totalorder %s255, %s257
      %p261 = scmp.eq.s32.totalorder %s22, 0
      %p262 = por %p260, %p261
      %p263 = scmp.ne.s32.totalorder %s255, %s257
      %p264 = scmp.eq.s32.totalorder %s27, 1
      %p265 = por %p263, %p264
      %p266 = scmp.ne.s32.totalorder %s257, %s258
      %p267 = scmp.eq.s32.totalorder %s27, 0
      %p268 = por %p266, %p267
      %p269 = scmp.ne.s32.totalorder %s257, %s258
      %p270 = scmp.eq.s32.totalorder %s28, 1
      %p271 = por %p269, %p270
      %p273 = scmp.ne.s32.totalorder %s258, %s272
      %p274 = scmp.eq.s32.totalorder %s28, 0
      %p275 = por %p273, %p274
      %s277 = sadd.s32 %s276, 1
      %p280 = scmp.eq.s32.totalorder %s22, 1
      %p281 = scmp.ne.s32.totalorder %s276, %s278
      %p282 = scmp.eq.s32.totalorder %s22, 0
      %p283 = por %p281, %p282
      %p284 = scmp.ne.s32.totalorder %s276, %s278
      %p285 = scmp.eq.s32.totalorder %s27, 1
      %p286 = por %p284, %p285
      %p287 = scmp.ne.s32.totalorder %s278, %s279
      %p288 = scmp.eq.s32.totalorder %s27, 0
      %p289 = por %p287, %p288
      %p290 = scmp.ne.s32.totalorder %s278, %s279
      %p291 = scmp.eq.s32.totalorder %s28, 1
      %p292 = por %p290, %p291
      %p294 = scmp.ne.s32.totalorder %s279, %s293
      %p295 = scmp.eq.s32.totalorder %s28, 0
      %p296 = por %p294, %p295
      %s297 = ssub.s32 %s22, %s29
      %p298 = scmp.eq.s32.totalorder %s297, 0
      %s300 = sadd.s32 %s299, 1
      %s301 = scalar_select %p298, %s299, %s300
      %p304 = pneg %p298
      %p305 = scmp.eq.s32.totalorder %s22, 1
      %p306 = por %p304, %p305
      %p307 = scmp.ne.s32.totalorder %s299, %s302
      %p308 = scmp.eq.s32.totalorder %s22, 0
      %p309 = por %p307, %p308
      %p310 = scmp.ne.s32.totalorder %s299, %s302
      %p311 = scmp.eq.s32.totalorder %s27, 1
      %p312 = por %p310, %p311
      %p313 = scmp.ne.s32.totalorder %s302, %s303
      %p314 = scmp.eq.s32.totalorder %s27, 0
      %p315 = por %p313, %p314
      %p316 = scmp.ne.s32.totalorder %s302, %s303
      %p317 = scmp.eq.s32.totalorder %s28, 1
      %p318 = por %p316, %p317
      %p320 = scmp.ne.s32.totalorder %s303, %s319
      %p321 = scmp.eq.s32.totalorder %s28, 0
      %p322 = por %p320, %p321
      %s323 = ssub.s32 %s22, %s29
      %p324 = scmp.eq.s32.totalorder %s323, 0
      %s326 = sadd.s32 %s325, 1
      %s327 = scalar_select %p324, %s325, %s326
      %p330 = pneg %p324
      %p331 = scmp.eq.s32.totalorder %s22, 1
      %p332 = por %p330, %p331
      %p333 = scmp.ne.s32.totalorder %s325, %s328
      %p334 = scmp.eq.s32.totalorder %s22, 0
      %p335 = por %p333, %p334
      %p336 = scmp.ne.s32.totalorder %s325, %s328
      %p337 = scmp.eq.s32.totalorder %s27, 1
      %p338 = por %p336, %p337
      %p339 = scmp.ne.s32.totalorder %s328, %s329
      %p340 = scmp.eq.s32.totalorder %s27, 0
      %p341 = por %p339, %p340
      %p342 = scmp.ne.s32.totalorder %s328, %s329
      %p343 = scmp.eq.s32.totalorder %s28, 1
      %p344 = por %p342, %p343
      %p346 = scmp.ne.s32.totalorder %s329, %s345
      %p347 = scmp.eq.s32.totalorder %s28, 0
      %p348 = por %p346, %p347
      %p349 = scmp.le.s32.totalorder 1, %s22
      %p350 = scmp.lt.s32.totalorder %s22, 3
      %p351 = pnand %p349, %p350
      %p352 = pneg %p351
      // Predicated region
      $region9: #{tpu_custom_call.1} parent=5 // pred_check
        _
      $region10: #{tpu_custom_call.1} parent=5 // pred_check_branch
        %354 = sbr.rel (%p351) target = $region12
      $region11: #{tpu_custom_call.1} parent=5 // pred_region
        %s355 = ssub.s32 %s22, 1
        // Predicated region
        $region13: #{tpu_custom_call.1} parent=11 // pred_check
          %p356 = pneg %p121
        $region14: #{tpu_custom_call.1} parent=11 // pred_check_branch
          %358 = sbr.rel (%p356) target = $region16
        $region15: #{tpu_custom_call.1} parent=11 // pred_region
          _
        $region16: #{tpu_custom_call.1} parent=11 // pred_fallthru
          _
        // Predicated region
        $region17: #{tpu_custom_call.1} parent=11 // pred_check
          %p359 = pneg %p142
        $region18: #{tpu_custom_call.1} parent=11 // pred_check_branch
          %361 = sbr.rel (%p359) target = $region20
        $region19: #{tpu_custom_call.1} parent=11 // pred_region
          _
        $region20: #{tpu_custom_call.1} parent=11 // pred_fallthru
          _
        // Predicated region
        $region21: #{tpu_custom_call.1} parent=11 // pred_check
          %p362 = pneg %p163
        $region22: #{tpu_custom_call.1} parent=11 // pred_check_branch
          %364 = sbr.rel (%p362) target = $region24
        $region23: #{tpu_custom_call.1} parent=11 // pred_region
          _
        $region24: #{tpu_custom_call.1} parent=11 // pred_fallthru
          _
        // Predicated region
        $region25: #{tpu_custom_call.1} parent=11 // pred_check
          %p365 = pneg %p184
        $region26: #{tpu_custom_call.1} parent=11 // pred_check_branch
          %367 = sbr.rel (%p365) target = $region28
        $region27: #{tpu_custom_call.1} parent=11 // pred_region
          %s369 = ssub.s32 6144, 6144
          %370 = vsyncadd [#allocation5], %s369
          %s371 = sshll.u32 [#allocation4], 4
          %s372 = int_to_ptr.vmem [resolvable:$true] %s371
          %377 = dma.hbm_to_vmem [thread:$0]  %s6, 6144, %s372, [#allocation5], 384, 384, 24
        $region28: #{tpu_custom_call.1} parent=11 // pred_fallthru
          _
        // Predicated region
        $region29: #{tpu_custom_call.1} parent=11 // pred_check
          %p378 = pneg %p205
        $region30: #{tpu_custom_call.1} parent=11 // pred_check_branch
          %380 = sbr.rel (%p378) target = $region32
        $region31: #{tpu_custom_call.1} parent=11 // pred_region
          _
        $region32: #{tpu_custom_call.1} parent=11 // pred_fallthru
          _
        // Predicated region
        $region33: #{tpu_custom_call.1} parent=11 // pred_check
          %p381 = pneg %p226
        $region34: #{tpu_custom_call.1} parent=11 // pred_check_branch
          %383 = sbr.rel (%p381) target = $region36
        $region35: #{tpu_custom_call.1} parent=11 // pred_region
          %s385 = ssub.s32 6144, 6144
          %386 = vsyncadd [#allocation7], %s385
          %s387 = sshll.u32 [#allocation6], 4
          %s388 = int_to_ptr.vmem [resolvable:$true] %s387
          %393 = dma.hbm_to_vmem [thread:$0]  %s8, 6144, %s388, [#allocation7], 384, 384, 24
        $region36: #{tpu_custom_call.1} parent=11 // pred_fallthru
          _
        // Predicated region
        $region37: #{tpu_custom_call.1} parent=11 // pred_check
          %p394 = pneg %p247
        $region38: #{tpu_custom_call.1} parent=11 // pred_check_branch
          %396 = sbr.rel (%p394) target = $region40
        $region39: #{tpu_custom_call.1} parent=11 // pred_region
          _
        $region40: #{tpu_custom_call.1} parent=11 // pred_fallthru
          _
        // Predicated region
        $region41: #{tpu_custom_call.1} parent=11 // pred_check
          %p397 = pneg %p268
        $region42: #{tpu_custom_call.1} parent=11 // pred_check_branch
          %399 = sbr.rel (%p397) target = $region44
        $region43: #{tpu_custom_call.1} parent=11 // pred_region
          _
        $region44: #{tpu_custom_call.1} parent=11 // pred_fallthru
          _
        // Predicated region
        $region45: #{tpu_custom_call.1} parent=11 // pred_check
          %p400 = pneg %p289
        $region46: #{tpu_custom_call.1} parent=11 // pred_check_branch
          %402 = sbr.rel (%p400) target = $region48
        $region47: #{tpu_custom_call.1} parent=11 // pred_region
          _
        $region48: #{tpu_custom_call.1} parent=11 // pred_fallthru
          _
      $region12: #{tpu_custom_call.1} parent=5 // pred_fallthru
        _
      %p403 = scmp.lt.s32.totalorder %s22, 2
      // Predicated region
      $region49: #{tpu_custom_call.1} parent=5 // pred_check
        %p404 = pneg %p403
      $region50: #{tpu_custom_call.1} parent=5 // pred_check_branch
        %406 = sbr.rel (%p404) target = $region52
      $region51: #{tpu_custom_call.1} parent=5 // pred_region
        // Predicated region
        $region53: #{tpu_custom_call.1} parent=51 // pred_check
          %p407 = pneg %p42
        $region54: #{tpu_custom_call.1} parent=51 // pred_check_branch
          %409 = sbr.rel (%p407) target = $region56
        $region55: #{tpu_custom_call.1} parent=51 // pred_region
          %s410 = sand.u32 %s32, 1
          %s411 = sand.u32 %s32, 1
          %s412 = smul.addr %s411, 16
          %s413 = scalar_lea.vmem [#allocation2], %s412
          %s414 = smul.addr %s22, 8
          %s415 = scalar_lea.vmem %s0, %s414
          // Predicated region
          $region57: #{tpu_custom_call.1} parent=55 // pred_check
            _
          $region58: #{tpu_custom_call.1} parent=55 // pred_check_branch
            %417 = sbr.rel (0) target = $region60
          $region59: #{tpu_custom_call.1} parent=55 // pred_region
            // Predicated region
            $region61: #{tpu_custom_call.1} parent=59 // pred_check
              _
            $region62: #{tpu_custom_call.1} parent=59 // pred_check_branch
              %419 = sbr.rel (0) target = $region64
            $region63: #{tpu_custom_call.1} parent=59 // pred_region
              // Predicated region
              $region76: #{tpu_custom_call.1} parent=63 // pred_check
                _
              $region77: #{tpu_custom_call.1} parent=63 // pred_check_branch
                %437 = sbr.rel (0) target = $region79
              $region78: #{tpu_custom_call.1} parent=63 // pred_region
                loop: start=0, step=1, limit=1
                $region80: #{tpu_custom_call.1} parent=78 // loop_pre_header
                  _
                $region81: #{tpu_custom_call.1} parent=78 // loop_header
                  %s439 = sphi 0, %s443
                  %p440 = scmp.ge.s32.totalorder %s439, 1
                  %s444 = sphi %s415, %s415
                  %s445 = sphi %s413, %s413
                $region82: #{tpu_custom_call.1} parent=78 // loop_header_branch
                  %442 = sbr.rel (%p440) target = $region86
                $region83: #{tpu_custom_call.1} parent=78 // loop_body
                  %v446 = vld [vmem:[%s444] sm:$0xff]
                  %447 = vst [vmem:[%s445] sm:$0xff] %v446
                  %v448 = vld [vmem:[%s444 + $0x10] sm:$0xff]
                  %449 = vst [vmem:[%s445 + $0x8] sm:$0xff] %v448
                $region84: #{tpu_custom_call.1} parent=78 // loop_footer
                  %s443 = sadd.s32 1, %s439
                $region85: #{tpu_custom_call.1} parent=78 // loop_footer_branch
                  %438 = sbr.rel target = $region81
                $region86: #{tpu_custom_call.1} parent=78 // loop_exit
                  _
              $region79: #{tpu_custom_call.1} parent=63 // pred_fallthru
                _
              // Predicated region
              $region87: #{tpu_custom_call.1} parent=63 // pred_check
                _
              $region88: #{tpu_custom_call.1} parent=63 // pred_check_branch
                %451 = sbr.rel target = $region90
              $region89: #{tpu_custom_call.1} parent=63 // pred_region
                _
              $region90: #{tpu_custom_call.1} parent=63 // pred_fallthru
                _
            $region64: #{tpu_custom_call.1} parent=59 // pred_fallthru
              _
            // Predicated region
            $region65: #{tpu_custom_call.1} parent=59 // pred_check
              _
            $region66: #{tpu_custom_call.1} parent=59 // pred_check_branch
              %421 = sbr.rel target = $region68
            $region67: #{tpu_custom_call.1} parent=59 // pred_region
              %s423 = ssub.s32 256, 1
              loop: start=0, step=1, limit=1
              $region69: #{tpu_custom_call.1} parent=67 // loop_pre_header
                _
              $region70: #{tpu_custom_call.1} parent=67 // loop_header
                %s425 = sphi 0, %s429
                %p426 = scmp.ge.s32.totalorder %s425, 1
                %s430 = sphi %s415, %s415
                %s431 = sphi %s413, %s413
              $region71: #{tpu_custom_call.1} parent=67 // loop_header_branch
                %428 = sbr.rel (%p426) target = $region75
              $region72: #{tpu_custom_call.1} parent=67 // loop_body
                %v432 = vld [vmem:[%s430] sm:%s423]
                %433 = vst [vmem:[%s431] sm:%s423] %v432
                %v434 = vld [vmem:[%s430 + $0x10] sm:%s423]
                %435 = vst [vmem:[%s431 + $0x8] sm:%s423] %v434
              $region73: #{tpu_custom_call.1} parent=67 // loop_footer
                %s429 = sadd.s32 1, %s425
              $region74: #{tpu_custom_call.1} parent=67 // loop_footer_branch
                %424 = sbr.rel target = $region70
              $region75: #{tpu_custom_call.1} parent=67 // loop_exit
                _
            $region68: #{tpu_custom_call.1} parent=59 // pred_fallthru
              _
          $region60: #{tpu_custom_call.1} parent=55 // pred_fallthru
            _
          %452 = vnop
        $region56: #{tpu_custom_call.1} parent=51 // pred_fallthru
          _
        // Predicated region
        $region91: #{tpu_custom_call.1} parent=51 // pred_check
          %p453 = pneg %p68
        $region92: #{tpu_custom_call.1} parent=51 // pred_check_branch
          %455 = sbr.rel (%p453) target = $region94
        $region93: #{tpu_custom_call.1} parent=51 // pred_region
          %s456 = sand.u32 %s58, 1
          %s457 = sand.u32 %s58, 1
          %s458 = smul.addr %s457, 16
          %s459 = scalar_lea.vmem [#allocation3], %s458
          %s460 = smul.addr %s22, 8
          %s461 = scalar_lea.vmem %s1, %s460
          // Predicated region
          $region95: #{tpu_custom_call.1} parent=93 // pred_check
            _
          $region96: #{tpu_custom_call.1} parent=93 // pred_check_branch
            %463 = sbr.rel (0) target = $region98
          $region97: #{tpu_custom_call.1} parent=93 // pred_region
            // Predicated region
            $region99: #{tpu_custom_call.1} parent=97 // pred_check
              _
            $region100: #{tpu_custom_call.1} parent=97 // pred_check_branch
              %465 = sbr.rel (0) target = $region102
            $region101: #{tpu_custom_call.1} parent=97 // pred_region
              // Predicated region
              $region114: #{tpu_custom_call.1} parent=101 // pred_check
                _
              $region115: #{tpu_custom_call.1} parent=101 // pred_check_branch
                %483 = sbr.rel (0) target = $region117
              $region116: #{tpu_custom_call.1} parent=101 // pred_region
                loop: start=0, step=1, limit=1
                $region118: #{tpu_custom_call.1} parent=116 // loop_pre_header
                  _
                $region119: #{tpu_custom_call.1} parent=116 // loop_header
                  %s485 = sphi 0, %s489
                  %p486 = scmp.ge.s32.totalorder %s485, 1
                  %s490 = sphi %s461, %s461
                  %s491 = sphi %s459, %s459
                $region120: #{tpu_custom_call.1} parent=116 // loop_header_branch
                  %488 = sbr.rel (%p486) target = $region124
                $region121: #{tpu_custom_call.1} parent=116 // loop_body
                  %v492 = vld [vmem:[%s490] sm:$0xff]
                  %493 = vst [vmem:[%s491] sm:$0xff] %v492
                  %v494 = vld [vmem:[%s490 + $0x10] sm:$0xff]
                  %495 = vst [vmem:[%s491 + $0x8] sm:$0xff] %v494
                $region122: #{tpu_custom_call.1} parent=116 // loop_footer
                  %s489 = sadd.s32 1, %s485
                $region123: #{tpu_custom_call.1} parent=116 // loop_footer_branch
                  %484 = sbr.rel target = $region119
                $region124: #{tpu_custom_call.1} parent=116 // loop_exit
                  _
              $region117: #{tpu_custom_call.1} parent=101 // pred_fallthru
                _
              // Predicated region
              $region125: #{tpu_custom_call.1} parent=101 // pred_check
                _
              $region126: #{tpu_custom_call.1} parent=101 // pred_check_branch
                %497 = sbr.rel target = $region128
              $region127: #{tpu_custom_call.1} parent=101 // pred_region
                _
              $region128: #{tpu_custom_call.1} parent=101 // pred_fallthru
                _
            $region102: #{tpu_custom_call.1} parent=97 // pred_fallthru
              _
            // Predicated region
            $region103: #{tpu_custom_call.1} parent=97 // pred_check
              _
            $region104: #{tpu_custom_call.1} parent=97 // pred_check_branch
              %467 = sbr.rel target = $region106
            $region105: #{tpu_custom_call.1} parent=97 // pred_region
              %s469 = ssub.s32 256, 1
              loop: start=0, step=1, limit=1
              $region107: #{tpu_custom_call.1} parent=105 // loop_pre_header
                _
              $region108: #{tpu_custom_call.1} parent=105 // loop_header
                %s471 = sphi 0, %s475
                %p472 = scmp.ge.s32.totalorder %s471, 1
                %s476 = sphi %s461, %s461
                %s477 = sphi %s459, %s459
              $region109: #{tpu_custom_call.1} parent=105 // loop_header_branch
                %474 = sbr.rel (%p472) target = $region113
              $region110: #{tpu_custom_call.1} parent=105 // loop_body
                %v478 = vld [vmem:[%s476] sm:%s469]
                %479 = vst [vmem:[%s477] sm:%s469] %v478
                %v480 = vld [vmem:[%s476 + $0x10] sm:%s469]
                %481 = vst [vmem:[%s477 + $0x8] sm:%s469] %v480
              $region111: #{tpu_custom_call.1} parent=105 // loop_footer
                %s475 = sadd.s32 1, %s471
              $region112: #{tpu_custom_call.1} parent=105 // loop_footer_branch
                %470 = sbr.rel target = $region108
              $region113: #{tpu_custom_call.1} parent=105 // loop_exit
                _
            $region106: #{tpu_custom_call.1} parent=97 // pred_fallthru
              _
          $region98: #{tpu_custom_call.1} parent=93 // pred_fallthru
            _
          %498 = vnop
        $region94: #{tpu_custom_call.1} parent=51 // pred_fallthru
          _
        // Predicated region
        $region129: #{tpu_custom_call.1} parent=51 // pred_check
          %p499 = pneg %p94
        $region130: #{tpu_custom_call.1} parent=51 // pred_check_branch
          %501 = sbr.rel (%p499) target = $region132
        $region131: #{tpu_custom_call.1} parent=51 // pred_region
          %p502 = scmp.lt.s32.totalorder %s22, 1
          %s503 = scalar_select %p502, %s22, 1
          %s504 = smul.addr %s503, 8
          %s505 = scalar_lea.vmem %s2, %s504
        $region132: #{tpu_custom_call.1} parent=51 // pred_fallthru
          _
      $region52: #{tpu_custom_call.1} parent=5 // pred_fallthru
        _
      %p506 = scmp.le.s32.totalorder 1, %s22
      %p507 = scmp.lt.s32.totalorder %s22, 3
      %p508 = pnand %p506, %p507
      %p509 = pneg %p508
      // Predicated region
      $region133: #{tpu_custom_call.1} parent=5 // pred_check
        _
      $region134: #{tpu_custom_call.1} parent=5 // pred_check_branch
        %511 = sbr.rel (%p508) target = $region136
      $region135: #{tpu_custom_call.1} parent=5 // pred_region
        %s512 = ssub.s32 %s22, 1
        %s513 = sand.u32 %s35, 1
        %s514 = sand.u32 %s35, 1
        %s515 = smul.addr %s514, 16
        %s516 = scalar_lea.vmem [#allocation2], %s515
        // Predicated region
        $region137: #{tpu_custom_call.1} parent=135 // pred_check
          %p517 = pneg %p48
        $region138: #{tpu_custom_call.1} parent=135 // pred_check_branch
          %519 = sbr.rel (%p517) target = $region140
        $region139: #{tpu_custom_call.1} parent=135 // pred_region
          _
        $region140: #{tpu_custom_call.1} parent=135 // pred_fallthru
          _
        %s520 = sand.u32 %s61, 1
        %s521 = sand.u32 %s61, 1
        %s522 = smul.addr %s521, 16
        %s523 = scalar_lea.vmem [#allocation3], %s522
        // Predicated region
        $region141: #{tpu_custom_call.1} parent=135 // pred_check
          %p524 = pneg %p74
        $region142: #{tpu_custom_call.1} parent=135 // pred_check_branch
          %526 = sbr.rel (%p524) target = $region144
        $region143: #{tpu_custom_call.1} parent=135 // pred_region
          _
        $region144: #{tpu_custom_call.1} parent=135 // pred_fallthru
          _
        // Predicated region
        $region145: #{tpu_custom_call.1} parent=135 // pred_check
          %p527 = pneg %p184
        $region146: #{tpu_custom_call.1} parent=135 // pred_check_branch
          %529 = sbr.rel (%p527) target = $region148
        $region147: #{tpu_custom_call.1} parent=135 // pred_region
          %530 = dma.done [#allocation5], 6144
        $region148: #{tpu_custom_call.1} parent=135 // pred_fallthru
          _
        // Predicated region
        $region149: #{tpu_custom_call.1} parent=135 // pred_check
          %p531 = pneg %p226
        $region150: #{tpu_custom_call.1} parent=135 // pred_check_branch
          %533 = sbr.rel (%p531) target = $region152
        $region151: #{tpu_custom_call.1} parent=135 // pred_region
          %534 = dma.done [#allocation7], 6144
        $region152: #{tpu_custom_call.1} parent=135 // pred_fallthru
          _
        %s535 = sand.u32 %s35, 1
        %s536 = sand.u32 %s35, 1
        %s537 = smul.addr %s536, 16
        %s538 = scalar_lea.vmem [#allocation2], %s537
        %p539 = pneg %p48
        %p540 = pneg %p45
        %s541 = sand.u32 %s61, 1
        %s542 = sand.u32 %s61, 1
        %s543 = smul.addr %s542, 16
        %s544 = scalar_lea.vmem [#allocation3], %s543
        %p545 = pneg %p74
        %p546 = pneg %p71
        %p547 = scmp.lt.s32.totalorder %s27, 1
        %s548 = scalar_select %p547, %s27, 1
        %s549 = smul.addr %s548, 8
        %s550 = scalar_lea.vmem %s2, %s549
        %p551 = pneg %p100
        %p552 = pneg %p97
        %p553 = pneg %p121
        %p554 = pneg %p118
        %p555 = pneg %p142
        %p556 = pneg %p139
        %p557 = pneg %p163
        %p558 = pneg %p160
        %p559 = pneg %p184
        %p560 = pneg %p181
        %p561 = pneg %p205
        %p562 = pneg %p202
        %p563 = pneg %p226
        %p564 = pneg %p223
        %p565 = pneg %p247
        %p566 = pneg %p244
        %p567 = pneg %p268
        %p568 = pneg %p265
        %p569 = pneg %p289
        %p570 = pneg %p286
        %p571 = pneg %p315
        %p572 = pneg %p312
        %s573 = sand.u32 %s302, 1
        %s574 = sand.u32 %s302, 1
        %s575 = smul.addr %s574, 16
        %s576 = scalar_lea.vmem [#allocation8], %s575
        %p577 = pneg %p341
        %p578 = pneg %p338
        %s579 = sand.u32 %s328, 1
        %s580 = sand.u32 %s328, 1
        %s581 = smul.addr %s580, 16
        %s582 = scalar_lea.vmem [#allocation9], %s581
        %p583 = scmp.lt.s32.totalorder %s27, 1
        %s584 = scalar_select %p583, %s27, 1
        %s585 = smul.addr %s584, 8
        %s586 = scalar_lea.vmem %s2, %s585
        %v587 = vld [vmem:[%s4] sm:$0xff]
        %v588 = vld [vmem:[#allocation4] sm:$0xff]
        %v589 = vld [vmem:[#allocation4 + $0x8] sm:$0xff]
        %v590 = vld [vmem:[#allocation4 + $0x10] sm:$0xff]
        %v591 = vld [vmem:[#allocation4 + $0x18] sm:$0xff]
        %v592 = vld [vmem:[#allocation4 + $0x20] sm:$0xff]
        %v593 = vld [vmem:[#allocation4 + $0x28] sm:$0xff]
        %v594 = vld [vmem:[#allocation4 + $0x30] sm:$0xff]
        %v595 = vld [vmem:[#allocation4 + $0x38] sm:$0xff]
        %v596 = vld [vmem:[#allocation4 + $0x40] sm:$0xff]
        %v597 = vld [vmem:[#allocation4 + $0x48] sm:$0xff]
        %v598 = vld [vmem:[#allocation4 + $0x50] sm:$0xff]
        %v599 = vld [vmem:[#allocation4 + $0x58] sm:$0xff]
        %v600 = vld [vmem:[#allocation4 + $0x60] sm:$0xff]
        %v601 = vld [vmem:[#allocation4 + $0x68] sm:$0xff]
        %v602 = vld [vmem:[#allocation4 + $0x70] sm:$0xff]
        %v603 = vld [vmem:[#allocation4 + $0x78] sm:$0xff]
        %v604 = vld [vmem:[#allocation4 + $0x80] sm:$0xff]
        %v605 = vld [vmem:[#allocation4 + $0x88] sm:$0xff]
        %v606 = vld [vmem:[#allocation4 + $0x90] sm:$0xff]
        %v607 = vld [vmem:[#allocation4 + $0x98] sm:$0xff]
        %v608 = vld [vmem:[#allocation4 + $0xa0] sm:$0xff]
        %v609 = vld [vmem:[#allocation4 + $0xa8] sm:$0xff]
        %v610 = vld [vmem:[#allocation4 + $0xb0] sm:$0xff]
        %v611 = vld [vmem:[#allocation4 + $0xb8] sm:$0xff]
        %v612 = vld [vmem:[#allocation4 + $0xc0] sm:$0xff]
        %v613 = vld [vmem:[#allocation4 + $0xc8] sm:$0xff]
        %v614 = vld [vmem:[#allocation4 + $0xd0] sm:$0xff]
        %v615 = vld [vmem:[#allocation4 + $0xd8] sm:$0xff]
        %v616 = vld [vmem:[#allocation4 + $0xe0] sm:$0xff]
        %v617 = vld [vmem:[#allocation4 + $0xe8] sm:$0xff]
        %v618 = vld [vmem:[#allocation4 + $0xf0] sm:$0xff]
        %v619 = vld [vmem:[#allocation4 + $0xf8] sm:$0xff]
        %v620 = vld [vmem:[#allocation4 + $0x100] sm:$0xff]
        %v621 = vld [vmem:[#allocation4 + $0x108] sm:$0xff]
        %v622 = vld [vmem:[#allocation4 + $0x110] sm:$0xff]
        %v623 = vld [vmem:[#allocation4 + $0x118] sm:$0xff]
        %v624 = vld [vmem:[#allocation4 + $0x120] sm:$0xff]
        %v625 = vld [vmem:[#allocation4 + $0x128] sm:$0xff]
        %v626 = vld [vmem:[#allocation4 + $0x130] sm:$0xff]
        %v627 = vld [vmem:[#allocation4 + $0x138] sm:$0xff]
        %v628 = vld [vmem:[#allocation4 + $0x140] sm:$0xff]
        %v629 = vld [vmem:[#allocation4 + $0x148] sm:$0xff]
        %v630 = vld [vmem:[#allocation4 + $0x150] sm:$0xff]
        %v631 = vld [vmem:[#allocation4 + $0x158] sm:$0xff]
        %v632 = vld [vmem:[#allocation4 + $0x160] sm:$0xff]
        %v633 = vld [vmem:[#allocation4 + $0x168] sm:$0xff]
        %v634 = vld [vmem:[#allocation4 + $0x170] sm:$0xff]
        %v635 = vld [vmem:[#allocation4 + $0x178] sm:$0xff]
        %v636 = vld [vmem:[#allocation6] sm:$0xff]
        %v637 = vld [vmem:[#allocation6 + $0x8] sm:$0xff]
        %v638 = vld [vmem:[#allocation6 + $0x10] sm:$0xff]
        %v639 = vld [vmem:[#allocation6 + $0x18] sm:$0xff]
        %v640 = vld [vmem:[#allocation6 + $0x20] sm:$0xff]
        %v641 = vld [vmem:[#allocation6 + $0x28] sm:$0xff]
        %v642 = vld [vmem:[#allocation6 + $0x30] sm:$0xff]
        %v643 = vld [vmem:[#allocation6 + $0x38] sm:$0xff]
        %v644 = vld [vmem:[#allocation6 + $0x40] sm:$0xff]
        %v645 = vld [vmem:[#allocation6 + $0x48] sm:$0xff]
        %v646 = vld [vmem:[#allocation6 + $0x50] sm:$0xff]
        %v647 = vld [vmem:[#allocation6 + $0x58] sm:$0xff]
        %v648 = vld [vmem:[#allocation6 + $0x60] sm:$0xff]
        %v649 = vld [vmem:[#allocation6 + $0x68] sm:$0xff]
        %v650 = vld [vmem:[#allocation6 + $0x70] sm:$0xff]
        %v651 = vld [vmem:[#allocation6 + $0x78] sm:$0xff]
        %v652 = vld [vmem:[#allocation6 + $0x80] sm:$0xff]
        %v653 = vld [vmem:[#allocation6 + $0x88] sm:$0xff]
        %v654 = vld [vmem:[#allocation6 + $0x90] sm:$0xff]
        %v655 = vld [vmem:[#allocation6 + $0x98] sm:$0xff]
        %v656 = vld [vmem:[#allocation6 + $0xa0] sm:$0xff]
        %v657 = vld [vmem:[#allocation6 + $0xa8] sm:$0xff]
        %v658 = vld [vmem:[#allocation6 + $0xb0] sm:$0xff]
        %v659 = vld [vmem:[#allocation6 + $0xb8] sm:$0xff]
        %v660 = vld [vmem:[#allocation6 + $0xc0] sm:$0xff]
        %v661 = vld [vmem:[#allocation6 + $0xc8] sm:$0xff]
        %v662 = vld [vmem:[#allocation6 + $0xd0] sm:$0xff]
        %v663 = vld [vmem:[#allocation6 + $0xd8] sm:$0xff]
        %v664 = vld [vmem:[#allocation6 + $0xe0] sm:$0xff]
        %v665 = vld [vmem:[#allocation6 + $0xe8] sm:$0xff]
        %v666 = vld [vmem:[#allocation6 + $0xf0] sm:$0xff]
        %v667 = vld [vmem:[#allocation6 + $0xf8] sm:$0xff]
        %v668 = vld [vmem:[#allocation6 + $0x100] sm:$0xff]
        %v669 = vld [vmem:[#allocation6 + $0x108] sm:$0xff]
        %v670 = vld [vmem:[#allocation6 + $0x110] sm:$0xff]
        %v671 = vld [vmem:[#allocation6 + $0x118] sm:$0xff]
        %v672 = vld [vmem:[#allocation6 + $0x120] sm:$0xff]
        %v673 = vld [vmem:[#allocation6 + $0x128] sm:$0xff]
        %v674 = vld [vmem:[#allocation6 + $0x130] sm:$0xff]
        %v675 = vld [vmem:[#allocation6 + $0x138] sm:$0xff]
        %v676 = vld [vmem:[#allocation6 + $0x140] sm:$0xff]
        %v677 = vld [vmem:[#allocation6 + $0x148] sm:$0xff]
        %v678 = vld [vmem:[#allocation6 + $0x150] sm:$0xff]
        %v679 = vld [vmem:[#allocation6 + $0x158] sm:$0xff]
        %v680 = vld [vmem:[#allocation6 + $0x160] sm:$0xff]
        %v681 = vld [vmem:[#allocation6 + $0x168] sm:$0xff]
        %v682 = vld [vmem:[#allocation6 + $0x170] sm:$0xff]
        %v683 = vld [vmem:[#allocation6 + $0x178] sm:$0xff]
        %v684 = vld [vmem:[%s10] sm:$0xff]
        %v685 = vld [vmem:[%s10 + $0x8] sm:$0xff]
        %v686 = vld [vmem:[%s10 + $0x10] sm:$0xff]
        %v687 = vld [vmem:[%s10 + $0x18] sm:$0xff]
        %v688 = vld [vmem:[%s10 + $0x20] sm:$0xff]
        %v689 = vld [vmem:[%s10 + $0x28] sm:$0xff]
        %v690 = vld [vmem:[%s10 + $0x30] sm:$0xff]
        %v691 = vld [vmem:[%s10 + $0x38] sm:$0xff]
        %v692 = vld [vmem:[%s10 + $0x40] sm:$0xff]
        %v693 = vld [vmem:[%s10 + $0x48] sm:$0xff]
        %v694 = vld [vmem:[%s10 + $0x50] sm:$0xff]
        %v695 = vld [vmem:[%s10 + $0x58] sm:$0xff]
        %v696 = vld [vmem:[%s10 + $0x60] sm:$0xff]
        %v697 = vld [vmem:[%s10 + $0x68] sm:$0xff]
        %v698 = vld [vmem:[%s10 + $0x70] sm:$0xff]
        %v699 = vld [vmem:[%s10 + $0x78] sm:$0xff]
        %v700 = vld [vmem:[%s5] sm:$0x1]
        %v702 = vlaneseq
        %v703 = vshrl.u32 %v702, 7
        %v704 = vsub.s32 0, %v703
        %v705 = vrot.slane %v700, %v704
        %v707 = vld [vmem:[%s7] sm:$0x7]
        %v709 = vlaneseq
        %v710 = vshrl.u32 %v709, 7
        %v711 = vsub.s32 0, %v710
        %v712 = vrot.slane %v707, %v711
        %v713 = vlaneseq
        %v714 = vshrl.u32 %v713, 7
        %v715 = vsub.s32 1, %v714
        %v716 = vrot.slane %v707, %v715
        %v717 = vlaneseq
        %v718 = vshrl.u32 %v717, 7
        %v719 = vsub.s32 2, %v718
        %v720 = vrot.slane %v707, %v719
        %v724 = vld [vmem:[%s9] sm:$0x1]
        %v726 = vlaneseq
        %v727 = vshrl.u32 %v726, 7
        %v728 = vsub.s32 0, %v727
        %v729 = vrot.slane %v724, %v728
        %v731 = vld [vmem:[%s11] sm:$0x1]
        %v733 = vlaneseq
        %v734 = vshrl.u32 %v733, 7
        %v735 = vsub.s32 0, %v734
        %v736 = vrot.slane %v731, %v735
        %v738 = vld [vmem:[%s586] sm:$0xff]
        %740 = vset.pattern.permute.xlu0 0
        %741 = vperm.xlu0 %740, %v738
        %v742 = vpop.permute.xlu0 %741
        %v744 = vld [vmem:[%s516] sm:$0xff]
        %vm745 = vcmask 64512
        %v747 = vsel %vm745, %v744, 0
        %749 = vmatprep.subr.mxu0 0.0
        %750 = vmatpush1.msra.mxu0 0.0
        %751 = vmatprep.subr.mxu0 0.0
        %752 = vmatpush1.msra.mxu0 0.0
        %753 = vmatprep.subr.mxu0 0.0
        %754 = vmatpush1.msra.mxu0 0.0
        %755 = vmatprep.subr.mxu0 0.0
        %756 = vmatpush1.msra.mxu0 0.0
        %757 = vmatprep.subr.mxu0 0.0
        %758 = vmatpush1.msra.mxu0 0.0
        %759 = vmatprep.subr.mxu0 0.0
        %760 = vmatpush1.msra.mxu0 0.0
        %761 = vmatprep.subr.mxu0 0.0
        %762 = vmatpush1.msra.mxu0 0.0
        %763 = vmatprep.subr.mxu0 0.0
        %764 = vmatpush1.msra.mxu0 0.0
        %765 = vmatprep.subr.mxu0 0.0
        %766 = vmatpush1.msra.mxu0 0.0
        %767 = vmatprep.subr.mxu0 0.0
        %768 = vmatpush1.msra.mxu0 0.0
        %769 = vmatprep.subr.mxu0 0.0
        %770 = vmatpush1.msra.mxu0 0.0
        %771 = vmatprep.subr.mxu0 0.0
        %772 = vmatpush1.msra.mxu0 0.0
        %773 = vmatprep.subr.mxu0 0.0
        %774 = vmatpush1.msra.mxu0 0.0
        %775 = vmatprep.subr.mxu0 0.0
        %776 = vmatpush1.msra.mxu0 0.0
        %777 = vmatprep.subr.mxu0 0.0
        %778 = vmatpush1.msra.mxu0 0.0
        %779 = vmatprep.subr.mxu0 0.0
        %780 = vmatpush1.msra.mxu0 %v587
        %781 = vmatprep.subr.mxu0 0.0
        %782 = vmatpush2.msra.mxu0 0.0
        %783 = vmatprep.subr.mxu0 0.0
        %784 = vmatpush2.msra.mxu0 0.0
        %785 = vmatprep.subr.mxu0 0.0
        %786 = vmatpush2.msra.mxu0 0.0
        %787 = vmatprep.subr.mxu0 0.0
        %788 = vmatpush2.msra.mxu0 0.0
        %789 = vmatprep.subr.mxu0 0.0
        %790 = vmatpush2.msra.mxu0 0.0
        %791 = vmatprep.subr.mxu0 0.0
        %792 = vmatpush2.msra.mxu0 0.0
        %793 = vmatprep.subr.mxu0 0.0
        %794 = vmatpush2.msra.mxu0 0.0
        %795 = vmatprep.subr.mxu0 0.0
        %796 = vmatpush2.msra.mxu0 0.0
        %797 = vmatprep.subr.mxu0 0.0
        %798 = vmatpush2.msra.mxu0 0.0
        %799 = vmatprep.subr.mxu0 0.0
        %800 = vmatpush2.msra.mxu0 0.0
        %801 = vmatprep.subr.mxu0 0.0
        %802 = vmatpush2.msra.mxu0 0.0
        %803 = vmatprep.subr.mxu0 0.0
        %804 = vmatpush2.msra.mxu0 0.0
        %805 = vmatprep.subr.mxu0 0.0
        %806 = vmatpush2.msra.mxu0 0.0
        %807 = vmatprep.subr.mxu0 0.0
        %808 = vmatpush2.msra.mxu0 0.0
        %809 = vmatprep.subr.mxu0 0.0
        %810 = vmatpush2.msra.mxu0 0.0
        %811 = vmatprep.subr.mxu0 0.0
        %812 = vmatpush2.msra.mxu0 0.0
        %813 = vmatprep.mubr.f32.mxu0 0.0
        %814 = vmatmul.mubr.f32.gmra.mxu0 %v747
        %v815 = vpop.f32.mrf.mxu0
        %v816 = vadd.f32 %v705, %v815
        %v817 = vpop.f32.mrf.mxu0
        %818 = vdwg.mxu0
        %v819 = vmax.f32 %v816, 0.0
        %820 = vmatprep.subr.mxu0 %v634
        %821 = vmatpush1.msra.mxu0 %v633
        %822 = vmatprep.subr.mxu0 %v631
        %823 = vmatpush1.msra.mxu0 %v630
        %824 = vmatprep.subr.mxu0 %v628
        %825 = vmatpush1.msra.mxu0 %v627
        %826 = vmatprep.subr.mxu0 %v625
        %827 = vmatpush1.msra.mxu0 %v624
        %828 = vmatprep.subr.mxu0 %v622
        %829 = vmatpush1.msra.mxu0 %v621
        %830 = vmatprep.subr.mxu0 %v619
        %831 = vmatpush1.msra.mxu0 %v618
        %832 = vmatprep.subr.mxu0 %v616
        %833 = vmatpush1.msra.mxu0 %v615
        %834 = vmatprep.subr.mxu0 %v613
        %835 = vmatpush1.msra.mxu0 %v612
        %836 = vmatprep.subr.mxu0 %v610
        %837 = vmatpush1.msra.mxu0 %v609
        %838 = vmatprep.subr.mxu0 %v607
        %839 = vmatpush1.msra.mxu0 %v606
        %840 = vmatprep.subr.mxu0 %v604
        %841 = vmatpush1.msra.mxu0 %v603
        %842 = vmatprep.subr.mxu0 %v601
        %843 = vmatpush1.msra.mxu0 %v600
        %844 = vmatprep.subr.mxu0 %v598
        %845 = vmatpush1.msra.mxu0 %v597
        %846 = vmatprep.subr.mxu0 %v595
        %847 = vmatpush1.msra.mxu0 %v594
        %848 = vmatprep.subr.mxu0 %v592
        %849 = vmatpush1.msra.mxu0 %v591
        %850 = vmatprep.subr.mxu0 %v589
        %851 = vmatpush1.msra.mxu0 %v588
        %852 = vmatprep.subr.mxu0 0.0
        %853 = vmatpush2.msra.mxu0 0.0
        %854 = vmatprep.subr.mxu0 0.0
        %855 = vmatpush2.msra.mxu0 0.0
        %856 = vmatprep.subr.mxu0 0.0
        %857 = vmatpush2.msra.mxu0 0.0
        %858 = vmatprep.subr.mxu0 0.0
        %859 = vmatpush2.msra.mxu0 0.0
        %860 = vmatprep.subr.mxu0 0.0
        %861 = vmatpush2.msra.mxu0 0.0
        %862 = vmatprep.subr.mxu0 0.0
        %863 = vmatpush2.msra.mxu0 0.0
        %864 = vmatprep.subr.mxu0 0.0
        %865 = vmatpush2.msra.mxu0 0.0
        %866 = vmatprep.subr.mxu0 0.0
        %867 = vmatpush2.msra.mxu0 0.0
        %868 = vmatprep.subr.mxu0 0.0
        %869 = vmatpush2.msra.mxu0 0.0
        %870 = vmatprep.subr.mxu0 0.0
        %871 = vmatpush2.msra.mxu0 0.0
        %872 = vmatprep.subr.mxu0 0.0
        %873 = vmatpush2.msra.mxu0 0.0
        %874 = vmatprep.subr.mxu0 0.0
        %875 = vmatpush2.msra.mxu0 0.0
        %876 = vmatprep.subr.mxu0 0.0
        %877 = vmatpush2.msra.mxu0 0.0
        %878 = vmatprep.subr.mxu0 0.0
        %879 = vmatpush2.msra.mxu0 0.0
        %880 = vmatprep.subr.mxu0 0.0
        %881 = vmatpush2.msra.mxu0 0.0
        %882 = vmatprep.subr.mxu0 0.0
        %883 = vmatpush2.msra.mxu0 0.0
        %884 = vmatprep.mubr.f32.mxu0 0.0
        %885 = vmatmul.mubr.f32.gmra.mxu0 %v819
        %v886 = vpop.f32.mrf.mxu0
        %v887 = vadd.f32 %v712, %v886
        %v888 = vpop.f32.mrf.mxu0
        %v889 = vadd.f32 %v716, %v888
        %890 = vdwg.mxu0
        %891 = vmatprep.subr.mxu0 0.0
        %892 = vmatpush1.msra.mxu0 %v635
        %893 = vmatprep.subr.mxu0 0.0
        %894 = vmatpush1.msra.mxu0 %v632
        %895 = vmatprep.subr.mxu0 0.0
        %896 = vmatpush1.msra.mxu0 %v629
        %897 = vmatprep.subr.mxu0 0.0
        %898 = vmatpush1.msra.mxu0 %v626
        %899 = vmatprep.subr.mxu0 0.0
        %900 = vmatpush1.msra.mxu0 %v623
        %901 = vmatprep.subr.mxu0 0.0
        %902 = vmatpush1.msra.mxu0 %v620
        %903 = vmatprep.subr.mxu0 0.0
        %904 = vmatpush1.msra.mxu0 %v617
        %905 = vmatprep.subr.mxu0 0.0
        %906 = vmatpush1.msra.mxu0 %v614
        %907 = vmatprep.subr.mxu0 0.0
        %908 = vmatpush1.msra.mxu0 %v611
        %909 = vmatprep.subr.mxu0 0.0
        %910 = vmatpush1.msra.mxu0 %v608
        %911 = vmatprep.subr.mxu0 0.0
        %912 = vmatpush1.msra.mxu0 %v605
        %913 = vmatprep.subr.mxu0 0.0
        %914 = vmatpush1.msra.mxu0 %v602
        %915 = vmatprep.subr.mxu0 0.0
        %916 = vmatpush1.msra.mxu0 %v599
        %917 = vmatprep.subr.mxu0 0.0
        %918 = vmatpush1.msra.mxu0 %v596
        %919 = vmatprep.subr.mxu0 0.0
        %920 = vmatpush1.msra.mxu0 %v593
        %921 = vmatprep.subr.mxu0 0.0
        %922 = vmatpush1.msra.mxu0 %v590
        %923 = vmatprep.subr.mxu0 0.0
        %924 = vmatpush2.msra.mxu0 0.0
        %925 = vmatprep.subr.mxu0 0.0
        %926 = vmatpush2.msra.mxu0 0.0
        %927 = vmatprep.subr.mxu0 0.0
        %928 = vmatpush2.msra.mxu0 0.0
        %929 = vmatprep.subr.mxu0 0.0
        %930 = vmatpush2.msra.mxu0 0.0
        %931 = vmatprep.subr.mxu0 0.0
        %932 = vmatpush2.msra.mxu0 0.0
        %933 = vmatprep.subr.mxu0 0.0
        %934 = vmatpush2.msra.mxu0 0.0
        %935 = vmatprep.subr.mxu0 0.0
        %936 = vmatpush2.msra.mxu0 0.0
        %937 = vmatprep.subr.mxu0 0.0
        %938 = vmatpush2.msra.mxu0 0.0
        %939 = vmatprep.subr.mxu0 0.0
        %940 = vmatpush2.msra.mxu0 0.0
        %941 = vmatprep.subr.mxu0 0.0
        %942 = vmatpush2.msra.mxu0 0.0
        %943 = vmatprep.subr.mxu0 0.0
        %944 = vmatpush2.msra.mxu0 0.0
        %945 = vmatprep.subr.mxu0 0.0
        %946 = vmatpush2.msra.mxu0 0.0
        %947 = vmatprep.subr.mxu0 0.0
        %948 = vmatpush2.msra.mxu0 0.0
        %949 = vmatprep.subr.mxu0 0.0
        %950 = vmatpush2.msra.mxu0 0.0
        %951 = vmatprep.subr.mxu0 0.0
        %952 = vmatpush2.msra.mxu0 0.0
        %953 = vmatprep.subr.mxu0 0.0
        %954 = vmatpush2.msra.mxu0 0.0
        %955 = vmatprep.mubr.f32.mxu0 0.0
        %956 = vmatmul.mubr.f32.gmra.mxu0 %v819
        %v957 = vpop.f32.mrf.mxu0
        %v958 = vadd.f32 %v720, %v957
        %v959 = vpop.f32.mrf.mxu0
        %960 = vdwg.mxu0
        %961 = vmatprep.subr.mxu0 %v682
        %962 = vmatpush1.msra.mxu0 %v681
        %963 = vmatprep.subr.mxu0 %v679
        %964 = vmatpush1.msra.mxu0 %v678
        %965 = vmatprep.subr.mxu0 %v676
        %966 = vmatpush1.msra.mxu0 %v675
        %967 = vmatprep.subr.mxu0 %v673
        %968 = vmatpush1.msra.mxu0 %v672
        %969 = vmatprep.subr.mxu0 %v670
        %970 = vmatpush1.msra.mxu0 %v669
        %971 = vmatprep.subr.mxu0 %v667
        %972 = vmatpush1.msra.mxu0 %v666
        %973 = vmatprep.subr.mxu0 %v664
        %974 = vmatpush1.msra.mxu0 %v663
        %975 = vmatprep.subr.mxu0 %v661
        %976 = vmatpush1.msra.mxu0 %v660
        %977 = vmatprep.subr.mxu0 %v658
        %978 = vmatpush1.msra.mxu0 %v657
        %979 = vmatprep.subr.mxu0 %v655
        %980 = vmatpush1.msra.mxu0 %v654
        %981 = vmatprep.subr.mxu0 %v652
        %982 = vmatpush1.msra.mxu0 %v651
        %983 = vmatprep.subr.mxu0 %v649
        %984 = vmatpush1.msra.mxu0 %v648
        %985 = vmatprep.subr.mxu0 %v646
        %986 = vmatpush1.msra.mxu0 %v645
        %987 = vmatprep.subr.mxu0 %v643
        %988 = vmatpush1.msra.mxu0 %v642
        %989 = vmatprep.subr.mxu0 %v640
        %990 = vmatpush1.msra.mxu0 %v639
        %991 = vmatprep.subr.mxu0 %v637
        %992 = vmatpush1.msra.mxu0 %v636
        %993 = vmatprep.subr.mxu0 0.0
        %994 = vmatpush2.msra.mxu0 0.0
        %995 = vmatprep.subr.mxu0 0.0
        %996 = vmatpush2.msra.mxu0 0.0
        %997 = vmatprep.subr.mxu0 0.0
        %998 = vmatpush2.msra.mxu0 0.0
        %999 = vmatprep.subr.mxu0 0.0
        %1000 = vmatpush2.msra.mxu0 0.0
        %1001 = vmatprep.subr.mxu0 0.0
        %1002 = vmatpush2.msra.mxu0 0.0
        %1003 = vmatprep.subr.mxu0 0.0
        %1004 = vmatpush2.msra.mxu0 0.0
        %1005 = vmatprep.subr.mxu0 0.0
        %1006 = vmatpush2.msra.mxu0 0.0
        %1007 = vmatprep.subr.mxu0 0.0
        %1008 = vmatpush2.msra.mxu0 0.0
        %1009 = vmatprep.subr.mxu0 0.0
        %1010 = vmatpush2.msra.mxu0 0.0
        %1011 = vmatprep.subr.mxu0 0.0
        %1012 = vmatpush2.msra.mxu0 0.0
        %1013 = vmatprep.subr.mxu0 0.0
        %1014 = vmatpush2.msra.mxu0 0.0
        %1015 = vmatprep.subr.mxu0 0.0
        %1016 = vmatpush2.msra.mxu0 0.0
        %1017 = vmatprep.subr.mxu0 0.0
        %1018 = vmatpush2.msra.mxu0 0.0
        %1019 = vmatprep.subr.mxu0 0.0
        %1020 = vmatpush2.msra.mxu0 0.0
        %1021 = vmatprep.subr.mxu0 0.0
        %1022 = vmatpush2.msra.mxu0 0.0
        %1023 = vmatprep.subr.mxu0 0.0
        %1024 = vmatpush2.msra.mxu0 0.0
        %1025 = vmatprep.mubr.f32.mxu0 0.0
        %1026 = vmatmul.mubr.f32.gmra.mxu0 0.0
        %v1027 = vpop.f32.mrf.mxu0
        %v1028 = vadd.f32 0.0, %v1027
        %v1029 = vpop.f32.mrf.mxu0
        %v1030 = vadd.f32 0.0, %v1029
        %1031 = vdwg.mxu0
        %1032 = vmatprep.subr.mxu0 0.0
        %1033 = vmatpush1.msra.mxu0 %v683
        %1034 = vmatprep.subr.mxu0 0.0
        %1035 = vmatpush1.msra.mxu0 %v680
        %1036 = vmatprep.subr.mxu0 0.0
        %1037 = vmatpush1.msra.mxu0 %v677
        %1038 = vmatprep.subr.mxu0 0.0
        %1039 = vmatpush1.msra.mxu0 %v674
        %1040 = vmatprep.subr.mxu0 0.0
        %1041 = vmatpush1.msra.mxu0 %v671
        %1042 = vmatprep.subr.mxu0 0.0
        %1043 = vmatpush1.msra.mxu0 %v668
        %1044 = vmatprep.subr.mxu0 0.0
        %1045 = vmatpush1.msra.mxu0 %v665
        %1046 = vmatprep.subr.mxu0 0.0
        %1047 = vmatpush1.msra.mxu0 %v662
        %1048 = vmatprep.subr.mxu0 0.0
        %1049 = vmatpush1.msra.mxu0 %v659
        %1050 = vmatprep.subr.mxu0 0.0
        %1051 = vmatpush1.msra.mxu0 %v656
        %1052 = vmatprep.subr.mxu0 0.0
        %1053 = vmatpush1.msra.mxu0 %v653
        %1054 = vmatprep.subr.mxu0 0.0
        %1055 = vmatpush1.msra.mxu0 %v650
        %1056 = vmatprep.subr.mxu0 0.0
        %1057 = vmatpush1.msra.mxu0 %v647
        %1058 = vmatprep.subr.mxu0 0.0
        %1059 = vmatpush1.msra.mxu0 %v644
        %1060 = vmatprep.subr.mxu0 0.0
        %1061 = vmatpush1.msra.mxu0 %v641
        %1062 = vmatprep.subr.mxu0 0.0
        %1063 = vmatpush1.msra.mxu0 %v638
        %1064 = vmatprep.subr.mxu0 0.0
        %1065 = vmatpush2.msra.mxu0 0.0
        %1066 = vmatprep.subr.mxu0 0.0
        %1067 = vmatpush2.msra.mxu0 0.0
        %1068 = vmatprep.subr.mxu0 0.0
        %1069 = vmatpush2.msra.mxu0 0.0
        %1070 = vmatprep.subr.mxu0 0.0
        %1071 = vmatpush2.msra.mxu0 0.0
        %1072 = vmatprep.subr.mxu0 0.0
        %1073 = vmatpush2.msra.mxu0 0.0
        %1074 = vmatprep.subr.mxu0 0.0
        %1075 = vmatpush2.msra.mxu0 0.0
        %1076 = vmatprep.subr.mxu0 0.0
        %1077 = vmatpush2.msra.mxu0 0.0
        %1078 = vmatprep.subr.mxu0 0.0
        %1079 = vmatpush2.msra.mxu0 0.0
        %1080 = vmatprep.subr.mxu0 0.0
        %1081 = vmatpush2.msra.mxu0 0.0
        %1082 = vmatprep.subr.mxu0 0.0
        %1083 = vmatpush2.msra.mxu0 0.0
        %1084 = vmatprep.subr.mxu0 0.0
        %1085 = vmatpush2.msra.mxu0 0.0
        %1086 = vmatprep.subr.mxu0 0.0
        %1087 = vmatpush2.msra.mxu0 0.0
        %1088 = vmatprep.subr.mxu0 0.0
        %1089 = vmatpush2.msra.mxu0 0.0
        %1090 = vmatprep.subr.mxu0 0.0
        %1091 = vmatpush2.msra.mxu0 0.0
        %1092 = vmatprep.subr.mxu0 0.0
        %1093 = vmatpush2.msra.mxu0 0.0
        %1094 = vmatprep.subr.mxu0 0.0
        %1095 = vmatpush2.msra.mxu0 0.0
        %1096 = vmatprep.mubr.f32.mxu0 0.0
        %1097 = vmatmul.mubr.f32.gmra.mxu0 0.0
        %v1098 = vpop.f32.mrf.mxu0
        %v1099 = vadd.f32 0.0, %v1098
        %v1100 = vpop.f32.mrf.mxu0
        %1101 = vdwg.mxu0
        %v1102 = vadd.f32 %v887, %v1028
        %v1103 = vxor.u32 %v1102, 2147483648
        %v1104 = vmul.f32 %v1103, 1.442695
        %v1105 = vpow.pop %v1104
        %v1106 = vadd.f32 %v1105, 1.0
        %v1107 = vrcp.pop %v1106
        %v1108 = vmul.f32 1.0, %v1107
        %v1109 = vadd.f32 %v889, %v1030
        %v1110 = vxor.u32 %v1109, 2147483648
        %v1111 = vmul.f32 %v1110, 1.442695
        %v1112 = vpow.pop %v1111
        %v1113 = vadd.f32 %v1112, 1.0
        %v1114 = vrcp.pop %v1113
        %v1115 = vmul.f32 1.0, %v1114
        %v1116 = vadd.f32 %v1099, %v729
        %v1117 = vmul.f32 %v1108, %v1116
        %v1118 = vadd.f32 %v958, %v1117
        %v1119 = vtanh.pop %v1118
        %v1120 = vsub.f32 1.0, %v1115
        %v1121 = vmul.f32 %v1120, %v1119
        %v1122 = vmul.f32 %v1115, 0.0
        %v1123 = vadd.f32 %v1121, %v1122
        %s1124 = scalar_lea.vmem %s516, 8 [#allocation2]
        %v1125 = vld [vmem:[%s1124] sm:$0xff]
        %v1127 = vsel %vm745, %v1125, 0
        %1129 = vmatprep.subr.mxu0 0.0
        %1130 = vmatpush1.msra.mxu0 0.0
        %1131 = vmatprep.subr.mxu0 0.0
        %1132 = vmatpush1.msra.mxu0 0.0
        %1133 = vmatprep.subr.mxu0 0.0
        %1134 = vmatpush1.msra.mxu0 0.0
        %1135 = vmatprep.subr.mxu0 0.0
        %1136 = vmatpush1.msra.mxu0 0.0
        %1137 = vmatprep.subr.mxu0 0.0
        %1138 = vmatpush1.msra.mxu0 0.0
        %1139 = vmatprep.subr.mxu0 0.0
        %1140 = vmatpush1.msra.mxu0 0.0
        %1141 = vmatprep.subr.mxu0 0.0
        %1142 = vmatpush1.msra.mxu0 0.0
        %1143 = vmatprep.subr.mxu0 0.0
        %1144 = vmatpush1.msra.mxu0 0.0
        %1145 = vmatprep.subr.mxu0 0.0
        %1146 = vmatpush1.msra.mxu0 0.0
        %1147 = vmatprep.subr.mxu0 0.0
        %1148 = vmatpush1.msra.mxu0 0.0
        %1149 = vmatprep.subr.mxu0 0.0
        %1150 = vmatpush1.msra.mxu0 0.0
        %1151 = vmatprep.subr.mxu0 0.0
        %1152 = vmatpush1.msra.mxu0 0.0
        %1153 = vmatprep.subr.mxu0 0.0
        %1154 = vmatpush1.msra.mxu0 0.0
        %1155 = vmatprep.subr.mxu0 0.0
        %1156 = vmatpush1.msra.mxu0 0.0
        %1157 = vmatprep.subr.mxu0 0.0
        %1158 = vmatpush1.msra.mxu0 0.0
        %1159 = vmatprep.subr.mxu0 0.0
        %1160 = vmatpush1.msra.mxu0 %v587
        %1161 = vmatprep.subr.mxu0 0.0
        %1162 = vmatpush2.msra.mxu0 0.0
        %1163 = vmatprep.subr.mxu0 0.0
        %1164 = vmatpush2.msra.mxu0 0.0
        %1165 = vmatprep.subr.mxu0 0.0
        %1166 = vmatpush2.msra.mxu0 0.0
        %1167 = vmatprep.subr.mxu0 0.0
        %1168 = vmatpush2.msra.mxu0 0.0
        %1169 = vmatprep.subr.mxu0 0.0
        %1170 = vmatpush2.msra.mxu0 0.0
        %1171 = vmatprep.subr.mxu0 0.0
        %1172 = vmatpush2.msra.mxu0 0.0
        %1173 = vmatprep.subr.mxu0 0.0
        %1174 = vmatpush2.msra.mxu0 0.0
        %1175 = vmatprep.subr.mxu0 0.0
        %1176 = vmatpush2.msra.mxu0 0.0
        %1177 = vmatprep.subr.mxu0 0.0
        %1178 = vmatpush2.msra.mxu0 0.0
        %1179 = vmatprep.subr.mxu0 0.0
        %1180 = vmatpush2.msra.mxu0 0.0
        %1181 = vmatprep.subr.mxu0 0.0
        %1182 = vmatpush2.msra.mxu0 0.0
        %1183 = vmatprep.subr.mxu0 0.0
        %1184 = vmatpush2.msra.mxu0 0.0
        %1185 = vmatprep.subr.mxu0 0.0
        %1186 = vmatpush2.msra.mxu0 0.0
        %1187 = vmatprep.subr.mxu0 0.0
        %1188 = vmatpush2.msra.mxu0 0.0
        %1189 = vmatprep.subr.mxu0 0.0
        %1190 = vmatpush2.msra.mxu0 0.0
        %1191 = vmatprep.subr.mxu0 0.0
        %1192 = vmatpush2.msra.mxu0 0.0
        %1193 = vmatprep.mubr.f32.mxu0 0.0
        %1194 = vmatmul.mubr.f32.gmra.mxu0 %v1127
        %v1195 = vpop.f32.mrf.mxu0
        %v1196 = vadd.f32 %v705, %v1195
        %v1197 = vpop.f32.mrf.mxu0
        %1198 = vdwg.mxu0
        %v1199 = vmax.f32 %v1196, 0.0
        %1200 = vmatprep.subr.mxu0 %v634
        %1201 = vmatpush1.msra.mxu0 %v633
        %1202 = vmatprep.subr.mxu0 %v631
        %1203 = vmatpush1.msra.mxu0 %v630
        %1204 = vmatprep.subr.mxu0 %v628
        %1205 = vmatpush1.msra.mxu0 %v627
        %1206 = vmatprep.subr.mxu0 %v625
        %1207 = vmatpush1.msra.mxu0 %v624
        %1208 = vmatprep.subr.mxu0 %v622
        %1209 = vmatpush1.msra.mxu0 %v621
        %1210 = vmatprep.subr.mxu0 %v619
        %1211 = vmatpush1.msra.mxu0 %v618
        %1212 = vmatprep.subr.mxu0 %v616
        %1213 = vmatpush1.msra.mxu0 %v615
        %1214 = vmatprep.subr.mxu0 %v613
        %1215 = vmatpush1.msra.mxu0 %v612
        %1216 = vmatprep.subr.mxu0 %v610
        %1217 = vmatpush1.msra.mxu0 %v609
        %1218 = vmatprep.subr.mxu0 %v607
        %1219 = vmatpush1.msra.mxu0 %v606
        %1220 = vmatprep.subr.mxu0 %v604
        %1221 = vmatpush1.msra.mxu0 %v603
        %1222 = vmatprep.subr.mxu0 %v601
        %1223 = vmatpush1.msra.mxu0 %v600
        %1224 = vmatprep.subr.mxu0 %v598
        %1225 = vmatpush1.msra.mxu0 %v597
        %1226 = vmatprep.subr.mxu0 %v595
        %1227 = vmatpush1.msra.mxu0 %v594
        %1228 = vmatprep.subr.mxu0 %v592
        %1229 = vmatpush1.msra.mxu0 %v591
        %1230 = vmatprep.subr.mxu0 %v589
        %1231 = vmatpush1.msra.mxu0 %v588
        %1232 = vmatprep.subr.mxu0 0.0
        %1233 = vmatpush2.msra.mxu0 0.0
        %1234 = vmatprep.subr.mxu0 0.0
        %1235 = vmatpush2.msra.mxu0 0.0
        %1236 = vmatprep.subr.mxu0 0.0
        %1237 = vmatpush2.msra.mxu0 0.0
        %1238 = vmatprep.subr.mxu0 0.0
        %1239 = vmatpush2.msra.mxu0 0.0
        %1240 = vmatprep.subr.mxu0 0.0
        %1241 = vmatpush2.msra.mxu0 0.0
        %1242 = vmatprep.subr.mxu0 0.0
        %1243 = vmatpush2.msra.mxu0 0.0
        %1244 = vmatprep.subr.mxu0 0.0
        %1245 = vmatpush2.msra.mxu0 0.0
        %1246 = vmatprep.subr.mxu0 0.0
        %1247 = vmatpush2.msra.mxu0 0.0
        %1248 = vmatprep.subr.mxu0 0.0
        %1249 = vmatpush2.msra.mxu0 0.0
        %1250 = vmatprep.subr.mxu0 0.0
        %1251 = vmatpush2.msra.mxu0 0.0
        %1252 = vmatprep.subr.mxu0 0.0
        %1253 = vmatpush2.msra.mxu0 0.0
        %1254 = vmatprep.subr.mxu0 0.0
        %1255 = vmatpush2.msra.mxu0 0.0
        %1256 = vmatprep.subr.mxu0 0.0
        %1257 = vmatpush2.msra.mxu0 0.0
        %1258 = vmatprep.subr.mxu0 0.0
        %1259 = vmatpush2.msra.mxu0 0.0
        %1260 = vmatprep.subr.mxu0 0.0
        %1261 = vmatpush2.msra.mxu0 0.0
        %1262 = vmatprep.subr.mxu0 0.0
        %1263 = vmatpush2.msra.mxu0 0.0
        %1264 = vmatprep.mubr.f32.mxu0 0.0
        %1265 = vmatmul.mubr.f32.gmra.mxu0 %v1199
        %v1266 = vpop.f32.mrf.mxu0
        %v1267 = vadd.f32 %v712, %v1266
        %v1268 = vpop.f32.mrf.mxu0
        %v1269 = vadd.f32 %v716, %v1268
        %1270 = vdwg.mxu0
        %1271 = vmatprep.subr.mxu0 0.0
        %1272 = vmatpush1.msra.mxu0 %v635
        %1273 = vmatprep.subr.mxu0 0.0
        %1274 = vmatpush1.msra.mxu0 %v632
        %1275 = vmatprep.subr.mxu0 0.0
        %1276 = vmatpush1.msra.mxu0 %v629
        %1277 = vmatprep.subr.mxu0 0.0
        %1278 = vmatpush1.msra.mxu0 %v626
        %1279 = vmatprep.subr.mxu0 0.0
        %1280 = vmatpush1.msra.mxu0 %v623
        %1281 = vmatprep.subr.mxu0 0.0
        %1282 = vmatpush1.msra.mxu0 %v620
        %1283 = vmatprep.subr.mxu0 0.0
        %1284 = vmatpush1.msra.mxu0 %v617
        %1285 = vmatprep.subr.mxu0 0.0
        %1286 = vmatpush1.msra.mxu0 %v614
        %1287 = vmatprep.subr.mxu0 0.0
        %1288 = vmatpush1.msra.mxu0 %v611
        %1289 = vmatprep.subr.mxu0 0.0
        %1290 = vmatpush1.msra.mxu0 %v608
        %1291 = vmatprep.subr.mxu0 0.0
        %1292 = vmatpush1.msra.mxu0 %v605
        %1293 = vmatprep.subr.mxu0 0.0
        %1294 = vmatpush1.msra.mxu0 %v602
        %1295 = vmatprep.subr.mxu0 0.0
        %1296 = vmatpush1.msra.mxu0 %v599
        %1297 = vmatprep.subr.mxu0 0.0
        %1298 = vmatpush1.msra.mxu0 %v596
        %1299 = vmatprep.subr.mxu0 0.0
        %1300 = vmatpush1.msra.mxu0 %v593
        %1301 = vmatprep.subr.mxu0 0.0
        %1302 = vmatpush1.msra.mxu0 %v590
        %1303 = vmatprep.subr.mxu0 0.0
        %1304 = vmatpush2.msra.mxu0 0.0
        %1305 = vmatprep.subr.mxu0 0.0
        %1306 = vmatpush2.msra.mxu0 0.0
        %1307 = vmatprep.subr.mxu0 0.0
        %1308 = vmatpush2.msra.mxu0 0.0
        %1309 = vmatprep.subr.mxu0 0.0
        %1310 = vmatpush2.msra.mxu0 0.0
        %1311 = vmatprep.subr.mxu0 0.0
        %1312 = vmatpush2.msra.mxu0 0.0
        %1313 = vmatprep.subr.mxu0 0.0
        %1314 = vmatpush2.msra.mxu0 0.0
        %1315 = vmatprep.subr.mxu0 0.0
        %1316 = vmatpush2.msra.mxu0 0.0
        %1317 = vmatprep.subr.mxu0 0.0
        %1318 = vmatpush2.msra.mxu0 0.0
        %1319 = vmatprep.subr.mxu0 0.0
        %1320 = vmatpush2.msra.mxu0 0.0
        %1321 = vmatprep.subr.mxu0 0.0
        %1322 = vmatpush2.msra.mxu0 0.0
        %1323 = vmatprep.subr.mxu0 0.0
        %1324 = vmatpush2.msra.mxu0 0.0
        %1325 = vmatprep.subr.mxu0 0.0
        %1326 = vmatpush2.msra.mxu0 0.0
        %1327 = vmatprep.subr.mxu0 0.0
        %1328 = vmatpush2.msra.mxu0 0.0
        %1329 = vmatprep.subr.mxu0 0.0
        %1330 = vmatpush2.msra.mxu0 0.0
        %1331 = vmatprep.subr.mxu0 0.0
        %1332 = vmatpush2.msra.mxu0 0.0
        %1333 = vmatprep.subr.mxu0 0.0
        %1334 = vmatpush2.msra.mxu0 0.0
        %1335 = vmatprep.mubr.f32.mxu0 0.0
        %1336 = vmatmul.mubr.f32.gmra.mxu0 %v1199
        %v1337 = vpop.f32.mrf.mxu0
        %v1338 = vadd.f32 %v720, %v1337
        %v1339 = vpop.f32.mrf.mxu0
        %1340 = vdwg.mxu0
        %1341 = vmatprep.subr.mxu0 %v682
        %1342 = vmatpush1.msra.mxu0 %v681
        %1343 = vmatprep.subr.mxu0 %v679
        %1344 = vmatpush1.msra.mxu0 %v678
        %1345 = vmatprep.subr.mxu0 %v676
        %1346 = vmatpush1.msra.mxu0 %v675
        %1347 = vmatprep.subr.mxu0 %v673
        %1348 = vmatpush1.msra.mxu0 %v672
        %1349 = vmatprep.subr.mxu0 %v670
        %1350 = vmatpush1.msra.mxu0 %v669
        %1351 = vmatprep.subr.mxu0 %v667
        %1352 = vmatpush1.msra.mxu0 %v666
        %1353 = vmatprep.subr.mxu0 %v664
        %1354 = vmatpush1.msra.mxu0 %v663
        %1355 = vmatprep.subr.mxu0 %v661
        %1356 = vmatpush1.msra.mxu0 %v660
        %1357 = vmatprep.subr.mxu0 %v658
        %1358 = vmatpush1.msra.mxu0 %v657
        %1359 = vmatprep.subr.mxu0 %v655
        %1360 = vmatpush1.msra.mxu0 %v654
        %1361 = vmatprep.subr.mxu0 %v652
        %1362 = vmatpush1.msra.mxu0 %v651
        %1363 = vmatprep.subr.mxu0 %v649
        %1364 = vmatpush1.msra.mxu0 %v648
        %1365 = vmatprep.subr.mxu0 %v646
        %1366 = vmatpush1.msra.mxu0 %v645
        %1367 = vmatprep.subr.mxu0 %v643
        %1368 = vmatpush1.msra.mxu0 %v642
        %1369 = vmatprep.subr.mxu0 %v640
        %1370 = vmatpush1.msra.mxu0 %v639
        %1371 = vmatprep.subr.mxu0 %v637
        %1372 = vmatpush1.msra.mxu0 %v636
        %1373 = vmatprep.subr.mxu0 0.0
        %1374 = vmatpush2.msra.mxu0 0.0
        %1375 = vmatprep.subr.mxu0 0.0
        %1376 = vmatpush2.msra.mxu0 0.0
        %1377 = vmatprep.subr.mxu0 0.0
        %1378 = vmatpush2.msra.mxu0 0.0
        %1379 = vmatprep.subr.mxu0 0.0
        %1380 = vmatpush2.msra.mxu0 0.0
        %1381 = vmatprep.subr.mxu0 0.0
        %1382 = vmatpush2.msra.mxu0 0.0
        %1383 = vmatprep.subr.mxu0 0.0
        %1384 = vmatpush2.msra.mxu0 0.0
        %1385 = vmatprep.subr.mxu0 0.0
        %1386 = vmatpush2.msra.mxu0 0.0
        %1387 = vmatprep.subr.mxu0 0.0
        %1388 = vmatpush2.msra.mxu0 0.0
        %1389 = vmatprep.subr.mxu0 0.0
        %1390 = vmatpush2.msra.mxu0 0.0
        %1391 = vmatprep.subr.mxu0 0.0
        %1392 = vmatpush2.msra.mxu0 0.0
        %1393 = vmatprep.subr.mxu0 0.0
        %1394 = vmatpush2.msra.mxu0 0.0
        %1395 = vmatprep.subr.mxu0 0.0
        %1396 = vmatpush2.msra.mxu0 0.0
        %1397 = vmatprep.subr.mxu0 0.0
        %1398 = vmatpush2.msra.mxu0 0.0
        %1399 = vmatprep.subr.mxu0 0.0
        %1400 = vmatpush2.msra.mxu0 0.0
        %1401 = vmatprep.subr.mxu0 0.0
        %1402 = vmatpush2.msra.mxu0 0.0
        %1403 = vmatprep.subr.mxu0 0.0
        %1404 = vmatpush2.msra.mxu0 0.0
        %1405 = vmatprep.mubr.f32.mxu0 0.0
        %1406 = vmatmul.mubr.f32.gmra.mxu0 %v1123
        %v1407 = vpop.f32.mrf.mxu0
        %v1408 = vadd.f32 0.0, %v1407
        %v1409 = vpop.f32.mrf.mxu0
        %v1410 = vadd.f32 0.0, %v1409
        %1411 = vdwg.mxu0
        %1412 = vmatprep.subr.mxu0 0.0
        %1413 = vmatpush1.msra.mxu0 %v683
        %1414 = vmatprep.subr.mxu0 0.0
        %1415 = vmatpush1.msra.mxu0 %v680
        %1416 = vmatprep.subr.mxu0 0.0
        %1417 = vmatpush1.msra.mxu0 %v677
        %1418 = vmatprep.subr.mxu0 0.0
        %1419 = vmatpush1.msra.mxu0 %v674
        %1420 = vmatprep.subr.mxu0 0.0
        %1421 = vmatpush1.msra.mxu0 %v671
        %1422 = vmatprep.subr.mxu0 0.0
        %1423 = vmatpush1.msra.mxu0 %v668
        %1424 = vmatprep.subr.mxu0 0.0
        %1425 = vmatpush1.msra.mxu0 %v665
        %1426 = vmatprep.subr.mxu0 0.0
        %1427 = vmatpush1.msra.mxu0 %v662
        %1428 = vmatprep.subr.mxu0 0.0
        %1429 = vmatpush1.msra.mxu0 %v659
        %1430 = vmatprep.subr.mxu0 0.0
        %1431 = vmatpush1.msra.mxu0 %v656
        %1432 = vmatprep.subr.mxu0 0.0
        %1433 = vmatpush1.msra.mxu0 %v653
        %1434 = vmatprep.subr.mxu0 0.0
        %1435 = vmatpush1.msra.mxu0 %v650
        %1436 = vmatprep.subr.mxu0 0.0
        %1437 = vmatpush1.msra.mxu0 %v647
        %1438 = vmatprep.subr.mxu0 0.0
        %1439 = vmatpush1.msra.mxu0 %v644
        %1440 = vmatprep.subr.mxu0 0.0
        %1441 = vmatpush1.msra.mxu0 %v641
        %1442 = vmatprep.subr.mxu0 0.0
        %1443 = vmatpush1.msra.mxu0 %v638
        %1444 = vmatprep.subr.mxu0 0.0
        %1445 = vmatpush2.msra.mxu0 0.0
        %1446 = vmatprep.subr.mxu0 0.0
        %1447 = vmatpush2.msra.mxu0 0.0
        %1448 = vmatprep.subr.mxu0 0.0
        %1449 = vmatpush2.msra.mxu0 0.0
        %1450 = vmatprep.subr.mxu0 0.0
        %1451 = vmatpush2.msra.mxu0 0.0
        %1452 = vmatprep.subr.mxu0 0.0
        %1453 = vmatpush2.msra.mxu0 0.0
        %1454 = vmatprep.subr.mxu0 0.0
        %1455 = vmatpush2.msra.mxu0 0.0
        %1456 = vmatprep.subr.mxu0 0.0
        %1457 = vmatpush2.msra.mxu0 0.0
        %1458 = vmatprep.subr.mxu0 0.0
        %1459 = vmatpush2.msra.mxu0 0.0
        %1460 = vmatprep.subr.mxu0 0.0
        %1461 = vmatpush2.msra.mxu0 0.0
        %1462 = vmatprep.subr.mxu0 0.0
        %1463 = vmatpush2.msra.mxu0 0.0
        %1464 = vmatprep.subr.mxu0 0.0
        %1465 = vmatpush2.msra.mxu0 0.0
        %1466 = vmatprep.subr.mxu0 0.0
        %1467 = vmatpush2.msra.mxu0 0.0
        %1468 = vmatprep.subr.mxu0 0.0
        %1469 = vmatpush2.msra.mxu0 0.0
        %1470 = vmatprep.subr.mxu0 0.0
        %1471 = vmatpush2.msra.mxu0 0.0
        %1472 = vmatprep.subr.mxu0 0.0
        %1473 = vmatpush2.msra.mxu0 0.0
        %1474 = vmatprep.subr.mxu0 0.0
        %1475 = vmatpush2.msra.mxu0 0.0
        %1476 = vmatprep.mubr.f32.mxu0 0.0
        %1477 = vmatmul.mubr.f32.gmra.mxu0 %v1123
        %v1478 = vpop.f32.mrf.mxu0
        %v1479 = vadd.f32 0.0, %v1478
        %v1480 = vpop.f32.mrf.mxu0
        %1481 = vdwg.mxu0
        %v1482 = vadd.f32 %v1267, %v1408
        %v1483 = vxor.u32 %v1482, 2147483648
        %v1484 = vmul.f32 %v1483, 1.442695
        %v1485 = vpow.pop %v1484
        %v1486 = vadd.f32 %v1485, 1.0
        %v1487 = vrcp.pop %v1486
        %v1488 = vmul.f32 1.0, %v1487
        %v1489 = vadd.f32 %v1269, %v1410
        %v1490 = vxor.u32 %v1489, 2147483648
        %v1491 = vmul.f32 %v1490, 1.442695
        %v1492 = vpow.pop %v1491
        %v1493 = vadd.f32 %v1492, 1.0
        %v1494 = vrcp.pop %v1493
        %v1495 = vmul.f32 1.0, %v1494
        %v1496 = vadd.f32 %v1479, %v729
        %v1497 = vmul.f32 %v1488, %v1496
        %v1498 = vadd.f32 %v1338, %v1497
        %v1499 = vtanh.pop %v1498
        %v1500 = vsub.f32 1.0, %v1495
        %v1501 = vmul.f32 %v1500, %v1499
        %v1502 = vmul.f32 %v1495, %v1123
        %v1503 = vadd.f32 %v1501, %v1502
        %1504 = vmatprep.subr.mxu0 %v682
        %1505 = vmatpush1.msra.mxu0 %v681
        %1506 = vmatprep.subr.mxu0 %v679
        %1507 = vmatpush1.msra.mxu0 %v678
        %1508 = vmatprep.subr.mxu0 %v676
        %1509 = vmatpush1.msra.mxu0 %v675
        %1510 = vmatprep.subr.mxu0 %v673
        %1511 = vmatpush1.msra.mxu0 %v672
        %1512 = vmatprep.subr.mxu0 %v670
        %1513 = vmatpush1.msra.mxu0 %v669
        %1514 = vmatprep.subr.mxu0 %v667
        %1515 = vmatpush1.msra.mxu0 %v666
        %1516 = vmatprep.subr.mxu0 %v664
        %1517 = vmatpush1.msra.mxu0 %v663
        %1518 = vmatprep.subr.mxu0 %v661
        %1519 = vmatpush1.msra.mxu0 %v660
        %1520 = vmatprep.subr.mxu0 %v658
        %1521 = vmatpush1.msra.mxu0 %v657
        %1522 = vmatprep.subr.mxu0 %v655
        %1523 = vmatpush1.msra.mxu0 %v654
        %1524 = vmatprep.subr.mxu0 %v652
        %1525 = vmatpush1.msra.mxu0 %v651
        %1526 = vmatprep.subr.mxu0 %v649
        %1527 = vmatpush1.msra.mxu0 %v648
        %1528 = vmatprep.subr.mxu0 %v646
        %1529 = vmatpush1.msra.mxu0 %v645
        %1530 = vmatprep.subr.mxu0 %v643
        %1531 = vmatpush1.msra.mxu0 %v642
        %1532 = vmatprep.subr.mxu0 %v640
        %1533 = vmatpush1.msra.mxu0 %v639
        %1534 = vmatprep.subr.mxu0 %v637
        %1535 = vmatpush1.msra.mxu0 %v636
        %1536 = vmatprep.subr.mxu0 0.0
        %1537 = vmatpush2.msra.mxu0 0.0
        %1538 = vmatprep.subr.mxu0 0.0
        %1539 = vmatpush2.msra.mxu0 0.0
        %1540 = vmatprep.subr.mxu0 0.0
        %1541 = vmatpush2.msra.mxu0 0.0
        %1542 = vmatprep.subr.mxu0 0.0
        %1543 = vmatpush2.msra.mxu0 0.0
        %1544 = vmatprep.subr.mxu0 0.0
        %1545 = vmatpush2.msra.mxu0 0.0
        %1546 = vmatprep.subr.mxu0 0.0
        %1547 = vmatpush2.msra.mxu0 0.0
        %1548 = vmatprep.subr.mxu0 0.0
        %1549 = vmatpush2.msra.mxu0 0.0
        %1550 = vmatprep.subr.mxu0 0.0
        %1551 = vmatpush2.msra.mxu0 0.0
        %1552 = vmatprep.subr.mxu0 0.0
        %1553 = vmatpush2.msra.mxu0 0.0
        %1554 = vmatprep.subr.mxu0 0.0
        %1555 = vmatpush2.msra.mxu0 0.0
        %1556 = vmatprep.subr.mxu0 0.0
        %1557 = vmatpush2.msra.mxu0 0.0
        %1558 = vmatprep.subr.mxu0 0.0
        %1559 = vmatpush2.msra.mxu0 0.0
        %1560 = vmatprep.subr.mxu0 0.0
        %1561 = vmatpush2.msra.mxu0 0.0
        %1562 = vmatprep.subr.mxu0 0.0
        %1563 = vmatpush2.msra.mxu0 0.0
        %1564 = vmatprep.subr.mxu0 0.0
        %1565 = vmatpush2.msra.mxu0 0.0
        %1566 = vmatprep.subr.mxu0 0.0
        %1567 = vmatpush2.msra.mxu0 0.0
        %1568 = vmatprep.mubr.f32.mxu0 0.0
        %1569 = vmatmul.mubr.f32.gmra.mxu0 %v1503
        %v1570 = vpop.f32.mrf.mxu0
        %v1571 = vadd.f32 0.0, %v1570
        %v1572 = vpop.f32.mrf.mxu0
        %v1573 = vadd.f32 0.0, %v1572
        %1574 = vdwg.mxu0
        %1575 = vmatprep.subr.mxu0 0.0
        %1576 = vmatpush1.msra.mxu0 %v683
        %1577 = vmatprep.subr.mxu0 0.0
        %1578 = vmatpush1.msra.mxu0 %v680
        %1579 = vmatprep.subr.mxu0 0.0
        %1580 = vmatpush1.msra.mxu0 %v677
        %1581 = vmatprep.subr.mxu0 0.0
        %1582 = vmatpush1.msra.mxu0 %v674
        %1583 = vmatprep.subr.mxu0 0.0
        %1584 = vmatpush1.msra.mxu0 %v671
        %1585 = vmatprep.subr.mxu0 0.0
        %1586 = vmatpush1.msra.mxu0 %v668
        %1587 = vmatprep.subr.mxu0 0.0
        %1588 = vmatpush1.msra.mxu0 %v665
        %1589 = vmatprep.subr.mxu0 0.0
        %1590 = vmatpush1.msra.mxu0 %v662
        %1591 = vmatprep.subr.mxu0 0.0
        %1592 = vmatpush1.msra.mxu0 %v659
        %1593 = vmatprep.subr.mxu0 0.0
        %1594 = vmatpush1.msra.mxu0 %v656
        %1595 = vmatprep.subr.mxu0 0.0
        %1596 = vmatpush1.msra.mxu0 %v653
        %1597 = vmatprep.subr.mxu0 0.0
        %1598 = vmatpush1.msra.mxu0 %v650
        %1599 = vmatprep.subr.mxu0 0.0
        %1600 = vmatpush1.msra.mxu0 %v647
        %1601 = vmatprep.subr.mxu0 0.0
        %1602 = vmatpush1.msra.mxu0 %v644
        %1603 = vmatprep.subr.mxu0 0.0
        %1604 = vmatpush1.msra.mxu0 %v641
        %1605 = vmatprep.subr.mxu0 0.0
        %1606 = vmatpush1.msra.mxu0 %v638
        %1607 = vmatprep.subr.mxu0 0.0
        %1608 = vmatpush2.msra.mxu0 0.0
        %1609 = vmatprep.subr.mxu0 0.0
        %1610 = vmatpush2.msra.mxu0 0.0
        %1611 = vmatprep.subr.mxu0 0.0
        %1612 = vmatpush2.msra.mxu0 0.0
        %1613 = vmatprep.subr.mxu0 0.0
        %1614 = vmatpush2.msra.mxu0 0.0
        %1615 = vmatprep.subr.mxu0 0.0
        %1616 = vmatpush2.msra.mxu0 0.0
        %1617 = vmatprep.subr.mxu0 0.0
        %1618 = vmatpush2.msra.mxu0 0.0
        %1619 = vmatprep.subr.mxu0 0.0
        %1620 = vmatpush2.msra.mxu0 0.0
        %1621 = vmatprep.subr.mxu0 0.0
        %1622 = vmatpush2.msra.mxu0 0.0
        %1623 = vmatprep.subr.mxu0 0.0
        %1624 = vmatpush2.msra.mxu0 0.0
        %1625 = vmatprep.subr.mxu0 0.0
        %1626 = vmatpush2.msra.mxu0 0.0
        %1627 = vmatprep.subr.mxu0 0.0
        %1628 = vmatpush2.msra.mxu0 0.0
        %1629 = vmatprep.subr.mxu0 0.0
        %1630 = vmatpush2.msra.mxu0 0.0
        %1631 = vmatprep.subr.mxu0 0.0
        %1632 = vmatpush2.msra.mxu0 0.0
        %1633 = vmatprep.subr.mxu0 0.0
        %1634 = vmatpush2.msra.mxu0 0.0
        %1635 = vmatprep.subr.mxu0 0.0
        %1636 = vmatpush2.msra.mxu0 0.0
        %1637 = vmatprep.subr.mxu0 0.0
        %1638 = vmatpush2.msra.mxu0 0.0
        %1639 = vmatprep.mubr.f32.mxu0 0.0
        %1640 = vmatmul.mubr.f32.gmra.mxu0 %v1503
        %v1641 = vpop.f32.mrf.mxu0
        %v1642 = vadd.f32 0.0, %v1641
        %v1643 = vpop.f32.mrf.mxu0
        %1644 = vdwg.mxu0
        %v1645 = vadd.f32 %v1642, %v729
        %v1646 = vld [vmem:[%s3] sm:$0xff]
        %v1647 = vld [vmem:[%s3 + $0x8] sm:$0xff]
        %v1648 = vld [vmem:[%s3 + $0x10] sm:$0xff]
        %v1649 = vadd.f32 %v1646, %v1571
        %v1650 = vxor.u32 %v1649, 2147483648
        %v1651 = vmul.f32 %v1650, 1.442695
        %v1652 = vpow.pop %v1651
        %v1653 = vadd.f32 %v1652, 1.0
        %v1654 = vrcp.pop %v1653
        %v1655 = vmul.f32 1.0, %v1654
        %v1656 = vadd.f32 %v1647, %v1573
        %v1657 = vxor.u32 %v1656, 2147483648
        %v1658 = vmul.f32 %v1657, 1.442695
        %v1659 = vpow.pop %v1658
        %v1660 = vadd.f32 %v1659, 1.0
        %v1661 = vrcp.pop %v1660
        %v1662 = vmul.f32 1.0, %v1661
        %v1663 = vmul.f32 %v1655, %v1645
        %v1664 = vadd.f32 %v1648, %v1663
        %v1665 = vtanh.pop %v1664
        %v1666 = vsub.f32 1.0, %v1662
        %v1667 = vmul.f32 %v1666, %v1665
        %v1668 = vmul.f32 %v1662, %v1503
        %v1669 = vadd.f32 %v1667, %v1668
        %1670 = vmatprep.subr.mxu0 0.0
        %1671 = vmatpush1.msra.mxu0 %v699
        %1672 = vmatprep.subr.mxu0 0.0
        %1673 = vmatpush1.msra.mxu0 %v698
        %1674 = vmatprep.subr.mxu0 0.0
        %1675 = vmatpush1.msra.mxu0 %v697
        %1676 = vmatprep.subr.mxu0 0.0
        %1677 = vmatpush1.msra.mxu0 %v696
        %1678 = vmatprep.subr.mxu0 0.0
        %1679 = vmatpush1.msra.mxu0 %v695
        %1680 = vmatprep.subr.mxu0 0.0
        %1681 = vmatpush1.msra.mxu0 %v694
        %1682 = vmatprep.subr.mxu0 0.0
        %1683 = vmatpush1.msra.mxu0 %v693
        %1684 = vmatprep.subr.mxu0 0.0
        %1685 = vmatpush1.msra.mxu0 %v692
        %1686 = vmatprep.subr.mxu0 0.0
        %1687 = vmatpush1.msra.mxu0 %v691
        %1688 = vmatprep.subr.mxu0 0.0
        %1689 = vmatpush1.msra.mxu0 %v690
        %1690 = vmatprep.subr.mxu0 0.0
        %1691 = vmatpush1.msra.mxu0 %v689
        %1692 = vmatprep.subr.mxu0 0.0
        %1693 = vmatpush1.msra.mxu0 %v688
        %1694 = vmatprep.subr.mxu0 0.0
        %1695 = vmatpush1.msra.mxu0 %v687
        %1696 = vmatprep.subr.mxu0 0.0
        %1697 = vmatpush1.msra.mxu0 %v686
        %1698 = vmatprep.subr.mxu0 0.0
        %1699 = vmatpush1.msra.mxu0 %v685
        %1700 = vmatprep.subr.mxu0 0.0
        %1701 = vmatpush1.msra.mxu0 %v684
        %1702 = vmatprep.subr.mxu0 0.0
        %1703 = vmatpush2.msra.mxu0 0.0
        %1704 = vmatprep.subr.mxu0 0.0
        %1705 = vmatpush2.msra.mxu0 0.0
        %1706 = vmatprep.subr.mxu0 0.0
        %1707 = vmatpush2.msra.mxu0 0.0
        %1708 = vmatprep.subr.mxu0 0.0
        %1709 = vmatpush2.msra.mxu0 0.0
        %1710 = vmatprep.subr.mxu0 0.0
        %1711 = vmatpush2.msra.mxu0 0.0
        %1712 = vmatprep.subr.mxu0 0.0
        %1713 = vmatpush2.msra.mxu0 0.0
        %1714 = vmatprep.subr.mxu0 0.0
        %1715 = vmatpush2.msra.mxu0 0.0
        %1716 = vmatprep.subr.mxu0 0.0
        %1717 = vmatpush2.msra.mxu0 0.0
        %1718 = vmatprep.subr.mxu0 0.0
        %1719 = vmatpush2.msra.mxu0 0.0
        %1720 = vmatprep.subr.mxu0 0.0
        %1721 = vmatpush2.msra.mxu0 0.0
        %1722 = vmatprep.subr.mxu0 0.0
        %1723 = vmatpush2.msra.mxu0 0.0
        %1724 = vmatprep.subr.mxu0 0.0
        %1725 = vmatpush2.msra.mxu0 0.0
        %1726 = vmatprep.subr.mxu0 0.0
        %1727 = vmatpush2.msra.mxu0 0.0
        %1728 = vmatprep.subr.mxu0 0.0
        %1729 = vmatpush2.msra.mxu0 0.0
        %1730 = vmatprep.subr.mxu0 0.0
        %1731 = vmatpush2.msra.mxu0 0.0
        %1732 = vmatprep.subr.mxu0 0.0
        %1733 = vmatpush2.msra.mxu0 0.0
        %1734 = vmatprep.mubr.f32.mxu0 0.0
        %1735 = vmatmul.mubr.f32.gmra.mxu0 %v1669
        %v1736 = vpop.f32.mrf.mxu0
        %v1737 = vadd.f32 %v736, %v1736
        %v1738 = vpop.f32.mrf.mxu0
        %1739 = vdwg.mxu0
        %v1740 = vadd.f32 %v1737, %v742
        %v1741 = vadd.f32 %v744, %v742
        %v1742 = vld [vmem:[%s523] sm:$0xff]
        %1743 = vst.msk [vmem:[%s576] sm:$0xff] %vm745, %v1740
        %v1744 = vmul.f32 %v1742, %v1741
        %v1745 = vsub.f32 1.0, %v1742
        %v1746 = vmul.f32 %v1745, %v1740
        %v1747 = vadd.f32 %v1744, %v1746
        %1748 = vst.msk [vmem:[%s582] sm:$0xff] %vm745, %v1747
        %s1749 = scalar_lea.vmem %s3, 24
        %v1750 = vld [vmem:[%s1749] sm:$0xff]
        %v1751 = vld [vmem:[%s1749 + $0x8] sm:$0xff]
        %v1752 = vld [vmem:[%s1749 + $0x10] sm:$0xff]
        %v1753 = vadd.f32 %v1750, %v1571
        %v1754 = vxor.u32 %v1753, 2147483648
        %v1755 = vmul.f32 %v1754, 1.442695
        %v1756 = vpow.pop %v1755
        %v1757 = vadd.f32 %v1756, 1.0
        %v1758 = vrcp.pop %v1757
        %v1759 = vmul.f32 1.0, %v1758
        %v1760 = vadd.f32 %v1751, %v1573
        %v1761 = vxor.u32 %v1760, 2147483648
        %v1762 = vmul.f32 %v1761, 1.442695
        %v1763 = vpow.pop %v1762
        %v1764 = vadd.f32 %v1763, 1.0
        %v1765 = vrcp.pop %v1764
        %v1766 = vmul.f32 1.0, %v1765
        %v1767 = vmul.f32 %v1759, %v1645
        %v1768 = vadd.f32 %v1752, %v1767
        %v1769 = vtanh.pop %v1768
        %v1770 = vsub.f32 1.0, %v1766
        %v1771 = vmul.f32 %v1770, %v1769
        %v1772 = vmul.f32 %v1766, %v1503
        %v1773 = vadd.f32 %v1771, %v1772
        %1774 = vmatprep.subr.mxu0 0.0
        %1775 = vmatpush1.msra.mxu0 %v699
        %1776 = vmatprep.subr.mxu0 0.0
        %1777 = vmatpush1.msra.mxu0 %v698
        %1778 = vmatprep.subr.mxu0 0.0
        %1779 = vmatpush1.msra.mxu0 %v697
        %1780 = vmatprep.subr.mxu0 0.0
        %1781 = vmatpush1.msra.mxu0 %v696
        %1782 = vmatprep.subr.mxu0 0.0
        %1783 = vmatpush1.msra.mxu0 %v695
        %1784 = vmatprep.subr.mxu0 0.0
        %1785 = vmatpush1.msra.mxu0 %v694
        %1786 = vmatprep.subr.mxu0 0.0
        %1787 = vmatpush1.msra.mxu0 %v693
        %1788 = vmatprep.subr.mxu0 0.0
        %1789 = vmatpush1.msra.mxu0 %v692
        %1790 = vmatprep.subr.mxu0 0.0
        %1791 = vmatpush1.msra.mxu0 %v691
        %1792 = vmatprep.subr.mxu0 0.0
        %1793 = vmatpush1.msra.mxu0 %v690
        %1794 = vmatprep.subr.mxu0 0.0
        %1795 = vmatpush1.msra.mxu0 %v689
        %1796 = vmatprep.subr.mxu0 0.0
        %1797 = vmatpush1.msra.mxu0 %v688
        %1798 = vmatprep.subr.mxu0 0.0
        %1799 = vmatpush1.msra.mxu0 %v687
        %1800 = vmatprep.subr.mxu0 0.0
        %1801 = vmatpush1.msra.mxu0 %v686
        %1802 = vmatprep.subr.mxu0 0.0
        %1803 = vmatpush1.msra.mxu0 %v685
        %1804 = vmatprep.subr.mxu0 0.0
        %1805 = vmatpush1.msra.mxu0 %v684
        %1806 = vmatprep.subr.mxu0 0.0
        %1807 = vmatpush2.msra.mxu0 0.0
        %1808 = vmatprep.subr.mxu0 0.0
        %1809 = vmatpush2.msra.mxu0 0.0
        %1810 = vmatprep.subr.mxu0 0.0
        %1811 = vmatpush2.msra.mxu0 0.0
        %1812 = vmatprep.subr.mxu0 0.0
        %1813 = vmatpush2.msra.mxu0 0.0
        %1814 = vmatprep.subr.mxu0 0.0
        %1815 = vmatpush2.msra.mxu0 0.0
        %1816 = vmatprep.subr.mxu0 0.0
        %1817 = vmatpush2.msra.mxu0 0.0
        %1818 = vmatprep.subr.mxu0 0.0
        %1819 = vmatpush2.msra.mxu0 0.0
        %1820 = vmatprep.subr.mxu0 0.0
        %1821 = vmatpush2.msra.mxu0 0.0
        %1822 = vmatprep.subr.mxu0 0.0
        %1823 = vmatpush2.msra.mxu0 0.0
        %1824 = vmatprep.subr.mxu0 0.0
        %1825 = vmatpush2.msra.mxu0 0.0
        %1826 = vmatprep.subr.mxu0 0.0
        %1827 = vmatpush2.msra.mxu0 0.0
        %1828 = vmatprep.subr.mxu0 0.0
        %1829 = vmatpush2.msra.mxu0 0.0
        %1830 = vmatprep.subr.mxu0 0.0
        %1831 = vmatpush2.msra.mxu0 0.0
        %1832 = vmatprep.subr.mxu0 0.0
        %1833 = vmatpush2.msra.mxu0 0.0
        %1834 = vmatprep.subr.mxu0 0.0
        %1835 = vmatpush2.msra.mxu0 0.0
        %1836 = vmatprep.subr.mxu0 0.0
        %1837 = vmatpush2.msra.mxu0 0.0
        %1838 = vmatprep.mubr.f32.mxu0 0.0
        %1839 = vmatmul.mubr.f32.gmra.mxu0 %v1773
        %v1840 = vpop.f32.mrf.mxu0
        %v1841 = vadd.f32 %v736, %v1840
        %v1842 = vpop.f32.mrf.mxu0
        %1843 = vdwg.mxu0
        %v1844 = vadd.f32 %v1841, %v742
        %v1845 = vld [vmem:[%s1124] sm:$0xff]
        %v1846 = vadd.f32 %v1845, %v742
        %s1847 = scalar_lea.vmem %s523, 8 [#allocation3]
        %v1848 = vld [vmem:[%s1847] sm:$0xff]
        %s1849 = scalar_lea.vmem %s576, 8 [#allocation8]
        %1850 = vst.msk [vmem:[%s1849] sm:$0xff] %vm745, %v1844
        %v1851 = vmul.f32 %v1848, %v1846
        %v1852 = vsub.f32 1.0, %v1848
        %v1853 = vmul.f32 %v1852, %v1844
        %v1854 = vadd.f32 %v1851, %v1853
        %s1855 = scalar_lea.vmem %s582, 8 [#allocation9]
        %1856 = vst.msk [vmem:[%s1855] sm:$0xff] %vm745, %v1854
        %s1857 = sand.u32 %s302, 1
        %s1858 = sand.u32 %s302, 1
        %s1859 = smul.addr %s1858, 16
        %s1860 = scalar_lea.vmem [#allocation8], %s1859
        %s1861 = sand.u32 %s328, 1
        %s1862 = sand.u32 %s328, 1
        %s1863 = smul.addr %s1862, 16
        %s1864 = scalar_lea.vmem [#allocation9], %s1863
        // Predicated region
        $region153: #{tpu_custom_call.1} parent=135 // pred_check
          %p1865 = pneg %p312
        $region154: #{tpu_custom_call.1} parent=135 // pred_check_branch
          %1867 = sbr.rel (%p1865) target = $region156
        $region155: #{tpu_custom_call.1} parent=135 // pred_region
          %s1868 = smul.addr %s27, 8
          %s1869 = scalar_lea.vmem %s12, %s1868
          // Predicated region
          $region157: #{tpu_custom_call.1} parent=155 // pred_check
            _
          $region158: #{tpu_custom_call.1} parent=155 // pred_check_branch
            %1871 = sbr.rel (0) target = $region160
          $region159: #{tpu_custom_call.1} parent=155 // pred_region
            // Predicated region
            $region161: #{tpu_custom_call.1} parent=159 // pred_check
              _
            $region162: #{tpu_custom_call.1} parent=159 // pred_check_branch
              %1873 = sbr.rel (0) target = $region164
            $region163: #{tpu_custom_call.1} parent=159 // pred_region
              // Predicated region
              $region176: #{tpu_custom_call.1} parent=163 // pred_check
                _
              $region177: #{tpu_custom_call.1} parent=163 // pred_check_branch
                %1891 = sbr.rel (0) target = $region179
              $region178: #{tpu_custom_call.1} parent=163 // pred_region
                loop: start=0, step=1, limit=1
                $region180: #{tpu_custom_call.1} parent=178 // loop_pre_header
                  _
                $region181: #{tpu_custom_call.1} parent=178 // loop_header
                  %s1893 = sphi 0, %s1897
                  %p1894 = scmp.ge.s32.totalorder %s1893, 1
                  %s1898 = sphi %s1860, %s1860
                  %s1899 = sphi %s1869, %s1869
                $region182: #{tpu_custom_call.1} parent=178 // loop_header_branch
                  %1896 = sbr.rel (%p1894) target = $region186
                $region183: #{tpu_custom_call.1} parent=178 // loop_body
                  %v1900 = vld [vmem:[%s1898] sm:$0xff]
                  %1901 = vst [vmem:[%s1899] sm:$0xff] %v1900
                  %v1902 = vld [vmem:[%s1898 + $0x8] sm:$0xff]
                  %1903 = vst [vmem:[%s1899 + $0x10] sm:$0xff] %v1902
                $region184: #{tpu_custom_call.1} parent=178 // loop_footer
                  %s1897 = sadd.s32 1, %s1893
                $region185: #{tpu_custom_call.1} parent=178 // loop_footer_branch
                  %1892 = sbr.rel target = $region181
                $region186: #{tpu_custom_call.1} parent=178 // loop_exit
                  _
              $region179: #{tpu_custom_call.1} parent=163 // pred_fallthru
                _
              // Predicated region
              $region187: #{tpu_custom_call.1} parent=163 // pred_check
                _
              $region188: #{tpu_custom_call.1} parent=163 // pred_check_branch
                %1905 = sbr.rel target = $region190
              $region189: #{tpu_custom_call.1} parent=163 // pred_region
                _
              $region190: #{tpu_custom_call.1} parent=163 // pred_fallthru
                _
            $region164: #{tpu_custom_call.1} parent=159 // pred_fallthru
              _
            // Predicated region
            $region165: #{tpu_custom_call.1} parent=159 // pred_check
              _
            $region166: #{tpu_custom_call.1} parent=159 // pred_check_branch
              %1875 = sbr.rel target = $region168
            $region167: #{tpu_custom_call.1} parent=159 // pred_region
              %s1877 = ssub.s32 256, 1
              loop: start=0, step=1, limit=1
              $region169: #{tpu_custom_call.1} parent=167 // loop_pre_header
                _
              $region170: #{tpu_custom_call.1} parent=167 // loop_header
                %s1879 = sphi 0, %s1883
                %p1880 = scmp.ge.s32.totalorder %s1879, 1
                %s1884 = sphi %s1860, %s1860
                %s1885 = sphi %s1869, %s1869
              $region171: #{tpu_custom_call.1} parent=167 // loop_header_branch
                %1882 = sbr.rel (%p1880) target = $region175
              $region172: #{tpu_custom_call.1} parent=167 // loop_body
                %v1886 = vld [vmem:[%s1884] sm:%s1877]
                %1887 = vst [vmem:[%s1885] sm:%s1877] %v1886
                %v1888 = vld [vmem:[%s1884 + $0x8] sm:%s1877]
                %1889 = vst [vmem:[%s1885 + $0x10] sm:%s1877] %v1888
              $region173: #{tpu_custom_call.1} parent=167 // loop_footer
                %s1883 = sadd.s32 1, %s1879
              $region174: #{tpu_custom_call.1} parent=167 // loop_footer_branch
                %1878 = sbr.rel target = $region170
              $region175: #{tpu_custom_call.1} parent=167 // loop_exit
                _
            $region168: #{tpu_custom_call.1} parent=159 // pred_fallthru
              _
          $region160: #{tpu_custom_call.1} parent=155 // pred_fallthru
            _
          %1906 = vnop
        $region156: #{tpu_custom_call.1} parent=135 // pred_fallthru
          _
        // Predicated region
        $region191: #{tpu_custom_call.1} parent=135 // pred_check
          %p1907 = pneg %p338
        $region192: #{tpu_custom_call.1} parent=135 // pred_check_branch
          %1909 = sbr.rel (%p1907) target = $region194
        $region193: #{tpu_custom_call.1} parent=135 // pred_region
          %s1910 = smul.addr %s27, 8
          %s1911 = scalar_lea.vmem %s13, %s1910
          // Predicated region
          $region195: #{tpu_custom_call.1} parent=193 // pred_check
            _
          $region196: #{tpu_custom_call.1} parent=193 // pred_check_branch
            %1913 = sbr.rel (0) target = $region198
          $region197: #{tpu_custom_call.1} parent=193 // pred_region
            // Predicated region
            $region199: #{tpu_custom_call.1} parent=197 // pred_check
              _
            $region200: #{tpu_custom_call.1} parent=197 // pred_check_branch
              %1915 = sbr.rel (0) target = $region202
            $region201: #{tpu_custom_call.1} parent=197 // pred_region
              // Predicated region
              $region214: #{tpu_custom_call.1} parent=201 // pred_check
                _
              $region215: #{tpu_custom_call.1} parent=201 // pred_check_branch
                %1933 = sbr.rel (0) target = $region217
              $region216: #{tpu_custom_call.1} parent=201 // pred_region
                loop: start=0, step=1, limit=1
                $region218: #{tpu_custom_call.1} parent=216 // loop_pre_header
                  _
                $region219: #{tpu_custom_call.1} parent=216 // loop_header
                  %s1935 = sphi 0, %s1939
                  %p1936 = scmp.ge.s32.totalorder %s1935, 1
                  %s1940 = sphi %s1864, %s1864
                  %s1941 = sphi %s1911, %s1911
                $region220: #{tpu_custom_call.1} parent=216 // loop_header_branch
                  %1938 = sbr.rel (%p1936) target = $region224
                $region221: #{tpu_custom_call.1} parent=216 // loop_body
                  %v1942 = vld [vmem:[%s1940] sm:$0xff]
                  %1943 = vst [vmem:[%s1941] sm:$0xff] %v1942
                  %v1944 = vld [vmem:[%s1940 + $0x8] sm:$0xff]
                  %1945 = vst [vmem:[%s1941 + $0x10] sm:$0xff] %v1944
                $region222: #{tpu_custom_call.1} parent=216 // loop_footer
                  %s1939 = sadd.s32 1, %s1935
                $region223: #{tpu_custom_call.1} parent=216 // loop_footer_branch
                  %1934 = sbr.rel target = $region219
                $region224: #{tpu_custom_call.1} parent=216 // loop_exit
                  _
              $region217: #{tpu_custom_call.1} parent=201 // pred_fallthru
                _
              // Predicated region
              $region225: #{tpu_custom_call.1} parent=201 // pred_check
                _
              $region226: #{tpu_custom_call.1} parent=201 // pred_check_branch
                %1947 = sbr.rel target = $region228
              $region227: #{tpu_custom_call.1} parent=201 // pred_region
                _
              $region228: #{tpu_custom_call.1} parent=201 // pred_fallthru
                _
            $region202: #{tpu_custom_call.1} parent=197 // pred_fallthru
              _
            // Predicated region
            $region203: #{tpu_custom_call.1} parent=197 // pred_check
              _
            $region204: #{tpu_custom_call.1} parent=197 // pred_check_branch
              %1917 = sbr.rel target = $region206
            $region205: #{tpu_custom_call.1} parent=197 // pred_region
              %s1919 = ssub.s32 256, 1
              loop: start=0, step=1, limit=1
              $region207: #{tpu_custom_call.1} parent=205 // loop_pre_header
                _
              $region208: #{tpu_custom_call.1} parent=205 // loop_header
                %s1921 = sphi 0, %s1925
                %p1922 = scmp.ge.s32.totalorder %s1921, 1
                %s1926 = sphi %s1864, %s1864
                %s1927 = sphi %s1911, %s1911
              $region209: #{tpu_custom_call.1} parent=205 // loop_header_branch
                %1924 = sbr.rel (%p1922) target = $region213
              $region210: #{tpu_custom_call.1} parent=205 // loop_body
                %v1928 = vld [vmem:[%s1926] sm:%s1919]
                %1929 = vst [vmem:[%s1927] sm:%s1919] %v1928
                %v1930 = vld [vmem:[%s1926 + $0x8] sm:%s1919]
                %1931 = vst [vmem:[%s1927 + $0x10] sm:%s1919] %v1930
              $region211: #{tpu_custom_call.1} parent=205 // loop_footer
                %s1925 = sadd.s32 1, %s1921
              $region212: #{tpu_custom_call.1} parent=205 // loop_footer_branch
                %1920 = sbr.rel target = $region208
              $region213: #{tpu_custom_call.1} parent=205 // loop_exit
                _
            $region206: #{tpu_custom_call.1} parent=197 // pred_fallthru
              _
          $region198: #{tpu_custom_call.1} parent=193 // pred_fallthru
            _
          %1948 = vnop
        $region194: #{tpu_custom_call.1} parent=135 // pred_fallthru
          _
      $region136: #{tpu_custom_call.1} parent=5 // pred_fallthru
        _
      %p1949 = scmp.le.s32.totalorder 2, %s22
      // Predicated region
      $region229: #{tpu_custom_call.1} parent=5 // pred_check
        %p1950 = pneg %p1949
      $region230: #{tpu_custom_call.1} parent=5 // pred_check_branch
        %1952 = sbr.rel (%p1950) target = $region232
      $region231: #{tpu_custom_call.1} parent=5 // pred_region
        %s1953 = ssub.s32 %s22, 2
        // Predicated region
        $region233: #{tpu_custom_call.1} parent=231 // pred_check
          %p1954 = pneg %p318
        $region234: #{tpu_custom_call.1} parent=231 // pred_check_branch
          %1956 = sbr.rel (%p1954) target = $region236
        $region235: #{tpu_custom_call.1} parent=231 // pred_region
          %s1957 = sand.u32 %s303, 1
          %s1958 = sand.u32 %s303, 1
          %s1959 = smul.addr %s1958, 16
          %s1960 = scalar_lea.vmem [#allocation8], %s1959
        $region236: #{tpu_custom_call.1} parent=231 // pred_fallthru
          _
        // Predicated region
        $region237: #{tpu_custom_call.1} parent=231 // pred_check
          %p1961 = pneg %p344
        $region238: #{tpu_custom_call.1} parent=231 // pred_check_branch
          %1963 = sbr.rel (%p1961) target = $region240
        $region239: #{tpu_custom_call.1} parent=231 // pred_region
          %s1964 = sand.u32 %s329, 1
          %s1965 = sand.u32 %s329, 1
          %s1966 = smul.addr %s1965, 16
          %s1967 = scalar_lea.vmem [#allocation9], %s1966
        $region240: #{tpu_custom_call.1} parent=231 // pred_fallthru
          _
      $region232: #{tpu_custom_call.1} parent=5 // pred_fallthru
        _
    $region6: #{tpu_custom_call.1} parent=1 // loop_footer
      %s26 = sadd.s32 1, %s22
    $region7: #{tpu_custom_call.1} parent=1 // loop_footer_branch
      %21 = sbr.rel target = $region3
    $region8: #{tpu_custom_call.1} parent=1 // loop_exit
      _
    %1968 = vsyncpa [#allocation5], 1
    %s1969 = scalar_lea.sflag [#allocation5], 1
    %1970 = vsyncpa %s1969, 1
    %1971 = vsyncpa [#allocation7], 1

</llo_original>
